<compile_context>
chip_gen: v7x
topology: tpu7x:2x2x1
jax: 0.10.0
libtpu: 0.0.40
codegen_flags: <defaults>
</compile_context>

<pallas_src>
import functools

import jax
import jax.numpy as jnp
from jax import lax
from jax.experimental import pallas as pl
from jax.experimental.pallas import tpu as pltpu


def make_lstm_kernel(num_layers: int, seq_len: int, batch_pad: int, hidden: int,
                     output_size: int):
    """Builds a Pallas kernel computing the full forward pass.

    Kernel ref order:
      inputs : x (T*B_pad, input_size) bf16 (time-major, row = t*B_pad + b),
               [w_ih_T bf16, w_hh_T bf16, bias f32] * num_layers,
               w_fc1_T bf16, b_fc1 f32, w_fc2 (O, 2H) f32, b_fc2 f32
      outputs: out (B_pad, output_size) f32
      scratch: xp  (T*B_pad, 4H) f32   -- hoisted per-layer input projection
               seq (T*B_pad, H) bf16   -- previous layer's hidden sequence
                                          (only allocated if num_layers > 1)
    """
    T, B, H = seq_len, batch_pad, hidden
    has_seq = num_layers > 1

    def kernel(*refs):
        n_layer_refs = 3 * num_layers
        x_ref = refs[0]
        layer_refs = refs[1:1 + n_layer_refs]
        w1_ref, b1_ref, w2_ref, b2_ref = refs[1 + n_layer_refs:5 + n_layer_refs]
        out_ref = refs[5 + n_layer_refs]
        xp_ref = refs[6 + n_layer_refs]
        seq_ref = refs[7 + n_layer_refs] if has_seq else None

        h_b = None
        for layer in range(num_layers):
            wih_ref, whh_ref, b_ref = layer_refs[3 * layer:3 * layer + 3]
            last_layer = (layer == num_layers - 1)

            # ---- hoisted input projection for ALL timesteps: one MXU matmul,
            #      staged into an aligned VMEM scratch (rows t*B_pad are
            #      multiples of 8 -> every per-step read is a clean vreg). ----
            if layer == 0:
                layer_in = x_ref[...]              # (T*B, I)  bf16
            else:
                layer_in = seq_ref[...]            # (T*B, H)  bf16 already
            xp_ref[...] = (jnp.dot(layer_in, wih_ref[...],
                                   preferred_element_type=jnp.float32)
                           + b_ref[...])           # (T*B, 4H) f32

            # ---- recurrent weight resident across the whole recurrence ----
            whh = whh_ref[...]                     # (H, 4H) bf16

            c = jnp.zeros((B, H), jnp.float32)
            h_b = jnp.zeros((B, H), jnp.bfloat16)  # bf16 h_{t-1} for the MXU

            # ---- fully unrolled time loop (T static) ----
            for t in range(T):
                g = (xp_ref[t * B:(t + 1) * B, :]              # aligned slab
                     + jnp.dot(h_b, whh,
                               preferred_element_type=jnp.float32))  # (B, 4H)
                # PyTorch gate order [i, f, g, o]; one full-width sigmoid,
                # one quarter-width tanh.  Gate math stays f32 (v5e-safe).
                sig = jax.nn.sigmoid(g)
                i_g = sig[:, 0 * H:1 * H]
                f_g = sig[:, 1 * H:2 * H]
                o_g = sig[:, 3 * H:4 * H]
                g_g = jnp.tanh(g[:, 2 * H:3 * H])
                c = f_g * c + i_g * g_g
                h = o_g * jnp.tanh(c)
                # Single f32->bf16 cast per step; reused for next-step matmul,
                # inter-layer store, and (at the end) fc1.
                h_b = h.astype(jnp.bfloat16)
                if not last_layer:
                    seq_ref[t * B:(t + 1) * B, :] = h_b

        # ---- fc1 -> ReLU -> fc2 on the last timestep's hidden state ----
        z = (jnp.dot(h_b, w1_ref[...],
                     preferred_element_type=jnp.float32) + b1_ref[...])
        z = jnp.maximum(z, 0.0)
        if output_size == 1:
            # N=1 MXU matmul is wasteful: VPU multiply + lane reduce instead.
            out_ref[...] = (jnp.sum(z * w2_ref[...], axis=-1, keepdims=True)
                            + b2_ref[...])
        else:
            out_ref[...] = (lax.dot_general(
                z.astype(jnp.bfloat16), w2_ref[...].astype(jnp.bfloat16),
                (((1,), (1,)), ((), ())),
                preferred_element_type=jnp.float32) + b2_ref[...])

    return kernel


def init_params(key, input_size, hidden_size, num_layers, output_size):
    """Deterministic init matching the PyTorch module's parameter shapes."""
    params = {"lstm": []}
    k_lstm = 1.0 / jnp.sqrt(hidden_size)
    keys = jax.random.split(key, 4 * num_layers + 4)
    ki = 0
    for layer in range(num_layers):
        in_sz = input_size if layer == 0 else hidden_size
        w_ih = jax.random.uniform(keys[ki], (4 * hidden_size, in_sz),
                                  minval=-k_lstm, maxval=k_lstm); ki += 1
        w_hh = jax.random.uniform(keys[ki], (4 * hidden_size, hidden_size),
                                  minval=-k_lstm, maxval=k_lstm); ki += 1
        b_ih = jax.random.uniform(keys[ki], (4 * hidden_size,),
                                  minval=-k_lstm, maxval=k_lstm); ki += 1
        b_hh = jax.random.uniform(keys[ki], (4 * hidden_size,),
                                  minval=-k_lstm, maxval=k_lstm); ki += 1
        params["lstm"].append((w_ih, w_hh, b_ih, b_hh))
    k1 = 1.0 / jnp.sqrt(hidden_size)
    params["fc1_w"] = jax.random.uniform(keys[ki], (2 * hidden_size, hidden_size),
                                         minval=-k1, maxval=k1); ki += 1
    params["fc1_b"] = jax.random.uniform(keys[ki], (2 * hidden_size,),
                                         minval=-k1, maxval=k1); ki += 1
    k2 = 1.0 / jnp.sqrt(2 * hidden_size)
    params["fc2_w"] = jax.random.uniform(keys[ki], (output_size, 2 * hidden_size),
                                         minval=-k2, maxval=k2); ki += 1
    params["fc2_b"] = jax.random.uniform(keys[ki], (output_size,),
                                         minval=-k2, maxval=k2); ki += 1
    return params


@functools.partial(jax.jit, static_argnames=("hidden_size", "num_layers",
                                             "output_size"))
def sol_price_lstm_forward(x, params, *, hidden_size, num_layers, output_size):
    """x: (B, T, input_size) float32, same as the PyTorch batch_first input."""
    B, T, I = x.shape
    H = hidden_size

    # Pad the batch to a full 8-row sublane so every per-step access in the
    # recurrence is a whole aligned vreg; padded rows are sliced off at the end.
    B_pad = max(8, ((B + 7) // 8) * 8)

    # Time-major, flattened to 2-D (row t*B_pad + b), bf16 for the MXU.
    x_tb = jnp.transpose(x, (1, 0, 2))                     # (T, B, I)
    if B_pad != B:
        x_tb = jnp.pad(x_tb, ((0, 0), (0, B_pad - B), (0, 0)))
    x_tb = x_tb.reshape(T * B_pad, I).astype(jnp.bfloat16)

    inputs = [x_tb]
    for layer in range(num_layers):
        w_ih, w_hh, b_ih, b_hh = params["lstm"][layer]
        inputs += [w_ih.T.astype(jnp.bfloat16),            # (in, 4H)
                   w_hh.T.astype(jnp.bfloat16),            # (H, 4H)
                   (b_ih + b_hh)[None, :].astype(jnp.float32)]
    inputs += [params["fc1_w"].T.astype(jnp.bfloat16),     # (H, 2H)
               params["fc1_b"][None, :].astype(jnp.float32),
               params["fc2_w"].astype(jnp.float32),        # (O, 2H)
               params["fc2_b"][None, :].astype(jnp.float32)]

    kernel = make_lstm_kernel(num_layers, T, B_pad, H, output_size)
    vmem = pltpu.MemorySpace.VMEM
    scratch_shapes = [
        pltpu.VMEM((T * B_pad, 4 * H), jnp.float32),   # hoisted input projection
    ]
    if num_layers > 1:
        scratch_shapes.append(
            pltpu.VMEM((T * B_pad, H), jnp.bfloat16))  # inter-layer hidden seq

    out = pl.pallas_call(
        kernel,
        out_shape=jax.ShapeDtypeStruct((B_pad, output_size), jnp.float32),
        in_specs=[pl.BlockSpec(memory_space=vmem)] * len(inputs),
        out_specs=pl.BlockSpec(memory_space=vmem),
        scratch_shapes=scratch_shapes,
    )(*inputs)
    return out[:B]


def reference_forward(x, params, hidden_size, num_layers):
    """Plain-JAX (f32) reference of the same forward pass."""
    B = x.shape[0]
    H = hidden_size
    layer_in = x.astype(jnp.float32)
    for layer in range(num_layers):
        w_ih, w_hh, b_ih, b_hh = params["lstm"][layer]
        h = jnp.zeros((B, H), jnp.float32)
        c = jnp.zeros((B, H), jnp.float32)
        outs = []
        for t in range(layer_in.shape[1]):
            g = layer_in[:, t, :] @ w_ih.T + h @ w_hh.T + b_ih + b_hh
            i_g = jax.nn.sigmoid(g[:, 0 * H:1 * H])
            f_g = jax.nn.sigmoid(g[:, 1 * H:2 * H])
            g_g = jnp.tanh(g[:, 2 * H:3 * H])
            o_g = jax.nn.sigmoid(g[:, 3 * H:4 * H])
            c = f_g * c + i_g * g_g
            h = o_g * jnp.tanh(c)
            outs.append(h)
        layer_in = jnp.stack(outs, axis=1)
    z = jnp.maximum(h @ params["fc1_w"].T + params["fc1_b"], 0.0)
    return z @ params["fc2_w"].T + params["fc2_b"]


if __name__ == "__main__":
    # Small shapes consistent with the module's forward:
    # batch=4, seq=8, input_size=8, hidden=32, num_layers=2, output=1.
    B, T, I = 4, 8, 8
    H, L, O = 32, 2, 1

    key = jax.random.PRNGKey(0)
    kx, kp = jax.random.split(key)
    x = jax.random.normal(kx, (B, T, I), dtype=jnp.float32)
    params = init_params(kp, I, H, L, O)

    out = sol_price_lstm_forward(x, params, hidden_size=H, num_layers=L,
                                 output_size=O)
    out = jax.block_until_ready(out)

    ref = reference_forward(x, params, H, L)
    assert out.shape == (B, O)
    assert bool(jnp.all(jnp.isfinite(out)))
    assert bool(jnp.allclose(out, ref, rtol=5e-2, atol=5e-2))
    print("KERNEL_OK")
</pallas_src>

<mosaic_0001>
module attributes {stable_mosaic.version = 11 : i64} {
  func.func @kernel(%arg0: memref<64x8xbf16, #tpu.memory_space<vmem>>, %arg1: memref<8x128xbf16, #tpu.memory_space<vmem>>, %arg2: memref<32x128xbf16, #tpu.memory_space<vmem>>, %arg3: memref<1x128xf32, #tpu.memory_space<vmem>>, %arg4: memref<32x128xbf16, #tpu.memory_space<vmem>>, %arg5: memref<32x128xbf16, #tpu.memory_space<vmem>>, %arg6: memref<1x128xf32, #tpu.memory_space<vmem>>, %arg7: memref<32x64xbf16, #tpu.memory_space<vmem>>, %arg8: memref<1x64xf32, #tpu.memory_space<vmem>>, %arg9: memref<1x64xf32, #tpu.memory_space<vmem>>, %arg10: memref<1x1xf32, #tpu.memory_space<vmem>>, %arg11: memref<8x1xf32, #tpu.memory_space<vmem>>, %arg12: memref<64x128xf32, #tpu.memory_space<vmem>>, %arg13: memref<64x32xbf16, #tpu.memory_space<vmem>>) attributes {dimension_semantics = [], scalar_prefetch = 0 : i64, scratch_operands = 2 : i64, tpu.core_type = #tpu.core_type<tc>} {
    %c0 = arith.constant 0 : index
    %c0_0 = arith.constant 0 : index
    %0 = vector.load %arg0[%c0, %c0_0] : memref<64x8xbf16, #tpu.memory_space<vmem>>, vector<64x8xbf16>
    %c0_1 = arith.constant 0 : index
    %c0_2 = arith.constant 0 : index
    %1 = vector.load %arg1[%c0_1, %c0_2] : memref<8x128xbf16, #tpu.memory_space<vmem>>, vector<8x128xbf16>
    %cst = arith.constant dense<0.000000e+00> : vector<64x128xf32>
    %2 = tpu.matmul %0, %1, %cst {dimension_numbers = #tpu.dot_dimension_numbers<[1], [0], [0], [1], [0, 0, 1, 1], [], []>} : vector<64x8xbf16>, vector<8x128xbf16>, vector<64x128xf32> -> vector<64x128xf32>
    %c0_3 = arith.constant 0 : index
    %c0_4 = arith.constant 0 : index
    %3 = vector.load %arg3[%c0_3, %c0_4] : memref<1x128xf32, #tpu.memory_space<vmem>>, vector<1x128xf32>
    %4 = vector.broadcast %3 : vector<1x128xf32> to vector<64x128xf32>
    %5 = arith.addf %2, %4 : vector<64x128xf32>
    %c0_5 = arith.constant 0 : index
    %c0_6 = arith.constant 0 : index
    %6 = vector.load %arg12[%c0_5, %c0_6] : memref<64x128xf32, #tpu.memory_space<vmem>>, vector<64x128xf32>
    tpu.vector_store %arg12[%c0_5, %c0_6], %5 {strides = array<i32>} : memref<64x128xf32, #tpu.memory_space<vmem>>, vector<64x128xf32>,
    %c0_7 = arith.constant 0 : index
    %c0_8 = arith.constant 0 : index
    %7 = vector.load %arg2[%c0_7, %c0_8] : memref<32x128xbf16, #tpu.memory_space<vmem>>, vector<32x128xbf16>
    %cst_9 = arith.constant 0.000000e+00 : f32
    %8 = vector.broadcast %cst_9 : f32 to vector<8x32xf32>
    %cst_10 = arith.constant 0.000000e+00 : bf16
    %9 = vector.broadcast %cst_10 : bf16 to vector<8x32xbf16>
    %c0_11 = arith.constant 0 : index
    %c0_12 = arith.constant 0 : index
    %10 = vector.load %arg12[%c0_11, %c0_12] : memref<64x128xf32, #tpu.memory_space<vmem>>, vector<8x128xf32>
    %cst_13 = arith.constant dense<0.000000e+00> : vector<8x128xf32>
    %11 = tpu.matmul %9, %7, %cst_13 {dimension_numbers = #tpu.dot_dimension_numbers<[1], [0], [0], [1], [0, 0, 1, 1], [], []>} : vector<8x32xbf16>, vector<32x128xbf16>, vector<8x128xf32> -> vector<8x128xf32>
    %12 = arith.addf %10, %11 : vector<8x128xf32>
    %13 = arith.negf %12 : vector<8x128xf32>
    %14 = math.exp %13 : vector<8x128xf32>
    %cst_14 = arith.constant 1.000000e+00 : f32
    %15 = vector.broadcast %cst_14 : f32 to vector<8x128xf32>
    %16 = arith.addf %15, %14 : vector<8x128xf32>
    %17 = arith.divf %15, %16 : vector<8x128xf32>
    %18 = vector.extract_strided_slice %17 {offsets = [0, 0], sizes = [8, 32], strides = [1, 1]} : vector<8x128xf32> to vector<8x32xf32>
    %19 = vector.extract_strided_slice %17 {offsets = [0, 32], sizes = [8, 32], strides = [1, 1]} : vector<8x128xf32> to vector<8x32xf32>
    %20 = vector.extract_strided_slice %17 {offsets = [0, 96], sizes = [8, 32], strides = [1, 1]} : vector<8x128xf32> to vector<8x32xf32>
    %21 = vector.extract_strided_slice %12 {offsets = [0, 64], sizes = [8, 32], strides = [1, 1]} : vector<8x128xf32> to vector<8x32xf32>
    %22 = math.tanh %21 : vector<8x32xf32>
    %23 = arith.mulf %19, %8 : vector<8x32xf32>
    %24 = arith.mulf %18, %22 : vector<8x32xf32>
    %25 = arith.addf %23, %24 : vector<8x32xf32>
    %26 = math.tanh %25 : vector<8x32xf32>
    %27 = arith.mulf %20, %26 : vector<8x32xf32>
    %28 = arith.truncf %27 : vector<8x32xf32> to vector<8x32xbf16>
    %c0_15 = arith.constant 0 : index
    %c0_16 = arith.constant 0 : index
    %29 = vector.load %arg13[%c0_15, %c0_16] : memref<64x32xbf16, #tpu.memory_space<vmem>>, vector<8x32xbf16>
    tpu.vector_store %arg13[%c0_15, %c0_16], %28 {strides = array<i32>} : memref<64x32xbf16, #tpu.memory_space<vmem>>, vector<8x32xbf16>,
    %c8 = arith.constant 8 : index
    %c0_17 = arith.constant 0 : index
    %30 = vector.load %arg12[%c8, %c0_17] : memref<64x128xf32, #tpu.memory_space<vmem>>, vector<8x128xf32>
    %cst_18 = arith.constant dense<0.000000e+00> : vector<8x128xf32>
    %31 = tpu.matmul %28, %7, %cst_18 {dimension_numbers = #tpu.dot_dimension_numbers<[1], [0], [0], [1], [0, 0, 1, 1], [], []>} : vector<8x32xbf16>, vector<32x128xbf16>, vector<8x128xf32> -> vector<8x128xf32>
    %32 = arith.addf %30, %31 : vector<8x128xf32>
    %33 = arith.negf %32 : vector<8x128xf32>
    %34 = math.exp %33 : vector<8x128xf32>
    %cst_19 = arith.constant 1.000000e+00 : f32
    %35 = vector.broadcast %cst_19 : f32 to vector<8x128xf32>
    %36 = arith.addf %35, %34 : vector<8x128xf32>
    %37 = arith.divf %35, %36 : vector<8x128xf32>
    %38 = vector.extract_strided_slice %37 {offsets = [0, 0], sizes = [8, 32], strides = [1, 1]} : vector<8x128xf32> to vector<8x32xf32>
    %39 = vector.extract_strided_slice %37 {offsets = [0, 32], sizes = [8, 32], strides = [1, 1]} : vector<8x128xf32> to vector<8x32xf32>
    %40 = vector.extract_strided_slice %37 {offsets = [0, 96], sizes = [8, 32], strides = [1, 1]} : vector<8x128xf32> to vector<8x32xf32>
    %41 = vector.extract_strided_slice %32 {offsets = [0, 64], sizes = [8, 32], strides = [1, 1]} : vector<8x128xf32> to vector<8x32xf32>
    %42 = math.tanh %41 : vector<8x32xf32>
    %43 = arith.mulf %39, %25 : vector<8x32xf32>
    %44 = arith.mulf %38, %42 : vector<8x32xf32>
    %45 = arith.addf %43, %44 : vector<8x32xf32>
    %46 = math.tanh %45 : vector<8x32xf32>
    %47 = arith.mulf %40, %46 : vector<8x32xf32>
    %48 = arith.truncf %47 : vector<8x32xf32> to vector<8x32xbf16>
    %c8_20 = arith.constant 8 : index
    %c0_21 = arith.constant 0 : index
    %49 = vector.load %arg13[%c8_20, %c0_21] : memref<64x32xbf16, #tpu.memory_space<vmem>>, vector<8x32xbf16>
    tpu.vector_store %arg13[%c8_20, %c0_21], %48 {strides = array<i32>} : memref<64x32xbf16, #tpu.memory_space<vmem>>, vector<8x32xbf16>,
    %c16 = arith.constant 16 : index
    %c0_22 = arith.constant 0 : index
    %50 = vector.load %arg12[%c16, %c0_22] : memref<64x128xf32, #tpu.memory_space<vmem>>, vector<8x128xf32>
    %cst_23 = arith.constant dense<0.000000e+00> : vector<8x128xf32>
    %51 = tpu.matmul %48, %7, %cst_23 {dimension_numbers = #tpu.dot_dimension_numbers<[1], [0], [0], [1], [0, 0, 1, 1], [], []>} : vector<8x32xbf16>, vector<32x128xbf16>, vector<8x128xf32> -> vector<8x128xf32>
    %52 = arith.addf %50, %51 : vector<8x128xf32>
    %53 = arith.negf %52 : vector<8x128xf32>
    %54 = math.exp %53 : vector<8x128xf32>
    %cst_24 = arith.constant 1.000000e+00 : f32
    %55 = vector.broadcast %cst_24 : f32 to vector<8x128xf32>
    %56 = arith.addf %55, %54 : vector<8x128xf32>
    %57 = arith.divf %55, %56 : vector<8x128xf32>
    %58 = vector.extract_strided_slice %57 {offsets = [0, 0], sizes = [8, 32], strides = [1, 1]} : vector<8x128xf32> to vector<8x32xf32>
    %59 = vector.extract_strided_slice %57 {offsets = [0, 32], sizes = [8, 32], strides = [1, 1]} : vector<8x128xf32> to vector<8x32xf32>
    %60 = vector.extract_strided_slice %57 {offsets = [0, 96], sizes = [8, 32], strides = [1, 1]} : vector<8x128xf32> to vector<8x32xf32>
    %61 = vector.extract_strided_slice %52 {offsets = [0, 64], sizes = [8, 32], strides = [1, 1]} : vector<8x128xf32> to vector<8x32xf32>
    %62 = math.tanh %61 : vector<8x32xf32>
    %63 = arith.mulf %59, %45 : vector<8x32xf32>
    %64 = arith.mulf %58, %62 : vector<8x32xf32>
    %65 = arith.addf %63, %64 : vector<8x32xf32>
    %66 = math.tanh %65 : vector<8x32xf32>
    %67 = arith.mulf %60, %66 : vector<8x32xf32>
    %68 = arith.truncf %67 : vector<8x32xf32> to vector<8x32xbf16>
    %c16_25 = arith.constant 16 : index
    %c0_26 = arith.constant 0 : index
    %69 = vector.load %arg13[%c16_25, %c0_26] : memref<64x32xbf16, #tpu.memory_space<vmem>>, vector<8x32xbf16>
    tpu.vector_store %arg13[%c16_25, %c0_26], %68 {strides = array<i32>} : memref<64x32xbf16, #tpu.memory_space<vmem>>, vector<8x32xbf16>,
    %c24 = arith.constant 24 : index
    %c0_27 = arith.constant 0 : index
    %70 = vector.load %arg12[%c24, %c0_27] : memref<64x128xf32, #tpu.memory_space<vmem>>, vector<8x128xf32>
    %cst_28 = arith.constant dense<0.000000e+00> : vector<8x128xf32>
    %71 = tpu.matmul %68, %7, %cst_28 {dimension_numbers = #tpu.dot_dimension_numbers<[1], [0], [0], [1], [0, 0, 1, 1], [], []>} : vector<8x32xbf16>, vector<32x128xbf16>, vector<8x128xf32> -> vector<8x128xf32>
    %72 = arith.addf %70, %71 : vector<8x128xf32>
    %73 = arith.negf %72 : vector<8x128xf32>
    %74 = math.exp %73 : vector<8x128xf32>
    %cst_29 = arith.constant 1.000000e+00 : f32
    %75 = vector.broadcast %cst_29 : f32 to vector<8x128xf32>
    %76 = arith.addf %75, %74 : vector<8x128xf32>
    %77 = arith.divf %75, %76 : vector<8x128xf32>
    %78 = vector.extract_strided_slice %77 {offsets = [0, 0], sizes = [8, 32], strides = [1, 1]} : vector<8x128xf32> to vector<8x32xf32>
    %79 = vector.extract_strided_slice %77 {offsets = [0, 32], sizes = [8, 32], strides = [1, 1]} : vector<8x128xf32> to vector<8x32xf32>
    %80 = vector.extract_strided_slice %77 {offsets = [0, 96], sizes = [8, 32], strides = [1, 1]} : vector<8x128xf32> to vector<8x32xf32>
    %81 = vector.extract_strided_slice %72 {offsets = [0, 64], sizes = [8, 32], strides = [1, 1]} : vector<8x128xf32> to vector<8x32xf32>
    %82 = math.tanh %81 : vector<8x32xf32>
    %83 = arith.mulf %79, %65 : vector<8x32xf32>
    %84 = arith.mulf %78, %82 : vector<8x32xf32>
    %85 = arith.addf %83, %84 : vector<8x32xf32>
    %86 = math.tanh %85 : vector<8x32xf32>
    %87 = arith.mulf %80, %86 : vector<8x32xf32>
    %88 = arith.truncf %87 : vector<8x32xf32> to vector<8x32xbf16>
    %c24_30 = arith.constant 24 : index
    %c0_31 = arith.constant 0 : index
    %89 = vector.load %arg13[%c24_30, %c0_31] : memref<64x32xbf16, #tpu.memory_space<vmem>>, vector<8x32xbf16>
    tpu.vector_store %arg13[%c24_30, %c0_31], %88 {strides = array<i32>} : memref<64x32xbf16, #tpu.memory_space<vmem>>, vector<8x32xbf16>,
    %c32 = arith.constant 32 : index
    %c0_32 = arith.constant 0 : index
    %90 = vector.load %arg12[%c32, %c0_32] : memref<64x128xf32, #tpu.memory_space<vmem>>, vector<8x128xf32>
    %cst_33 = arith.constant dense<0.000000e+00> : vector<8x128xf32>
    %91 = tpu.matmul %88, %7, %cst_33 {dimension_numbers = #tpu.dot_dimension_numbers<[1], [0], [0], [1], [0, 0, 1, 1], [], []>} : vector<8x32xbf16>, vector<32x128xbf16>, vector<8x128xf32> -> vector<8x128xf32>
    %92 = arith.addf %90, %91 : vector<8x128xf32>
    %93 = arith.negf %92 : vector<8x128xf32>
    %94 = math.exp %93 : vector<8x128xf32>
    %cst_34 = arith.constant 1.000000e+00 : f32
    %95 = vector.broadcast %cst_34 : f32 to vector<8x128xf32>
    %96 = arith.addf %95, %94 : vector<8x128xf32>
    %97 = arith.divf %95, %96 : vector<8x128xf32>
    %98 = vector.extract_strided_slice %97 {offsets = [0, 0], sizes = [8, 32], strides = [1, 1]} : vector<8x128xf32> to vector<8x32xf32>
    %99 = vector.extract_strided_slice %97 {offsets = [0, 32], sizes = [8, 32], strides = [1, 1]} : vector<8x128xf32> to vector<8x32xf32>
    %100 = vector.extract_strided_slice %97 {offsets = [0, 96], sizes = [8, 32], strides = [1, 1]} : vector<8x128xf32> to vector<8x32xf32>
    %101 = vector.extract_strided_slice %92 {offsets = [0, 64], sizes = [8, 32], strides = [1, 1]} : vector<8x128xf32> to vector<8x32xf32>
    %102 = math.tanh %101 : vector<8x32xf32>
    %103 = arith.mulf %99, %85 : vector<8x32xf32>
    %104 = arith.mulf %98, %102 : vector<8x32xf32>
    %105 = arith.addf %103, %104 : vector<8x32xf32>
    %106 = math.tanh %105 : vector<8x32xf32>
    %107 = arith.mulf %100, %106 : vector<8x32xf32>
    %108 = arith.truncf %107 : vector<8x32xf32> to vector<8x32xbf16>
    %c32_35 = arith.constant 32 : index
    %c0_36 = arith.constant 0 : index
    %109 = vector.load %arg13[%c32_35, %c0_36] : memref<64x32xbf16, #tpu.memory_space<vmem>>, vector<8x32xbf16>
    tpu.vector_store %arg13[%c32_35, %c0_36], %108 {strides = array<i32>} : memref<64x32xbf16, #tpu.memory_space<vmem>>, vector<8x32xbf16>,
    %c40 = arith.constant 40 : index
    %c0_37 = arith.constant 0 : index
    %110 = vector.load %arg12[%c40, %c0_37] : memref<64x128xf32, #tpu.memory_space<vmem>>, vector<8x128xf32>
    %cst_38 = arith.constant dense<0.000000e+00> : vector<8x128xf32>
    %111 = tpu.matmul %108, %7, %cst_38 {dimension_numbers = #tpu.dot_dimension_numbers<[1], [0], [0], [1], [0, 0, 1, 1], [], []>} : vector<8x32xbf16>, vector<32x128xbf16>, vector<8x128xf32> -> vector<8x128xf32>
    %112 = arith.addf %110, %111 : vector<8x128xf32>
    %113 = arith.negf %112 : vector<8x128xf32>
    %114 = math.exp %113 : vector<8x128xf32>
    %cst_39 = arith.constant 1.000000e+00 : f32
    %115 = vector.broadcast %cst_39 : f32 to vector<8x128xf32>
    %116 = arith.addf %115, %114 : vector<8x128xf32>
    %117 = arith.divf %115, %116 : vector<8x128xf32>
    %118 = vector.extract_strided_slice %117 {offsets = [0, 0], sizes = [8, 32], strides = [1, 1]} : vector<8x128xf32> to vector<8x32xf32>
    %119 = vector.extract_strided_slice %117 {offsets = [0, 32], sizes = [8, 32], strides = [1, 1]} : vector<8x128xf32> to vector<8x32xf32>
    %120 = vector.extract_strided_slice %117 {offsets = [0, 96], sizes = [8, 32], strides = [1, 1]} : vector<8x128xf32> to vector<8x32xf32>
    %121 = vector.extract_strided_slice %112 {offsets = [0, 64], sizes = [8, 32], strides = [1, 1]} : vector<8x128xf32> to vector<8x32xf32>
    %122 = math.tanh %121 : vector<8x32xf32>
    %123 = arith.mulf %119, %105 : vector<8x32xf32>
    %124 = arith.mulf %118, %122 : vector<8x32xf32>
    %125 = arith.addf %123, %124 : vector<8x32xf32>
    %126 = math.tanh %125 : vector<8x32xf32>
    %127 = arith.mulf %120, %126 : vector<8x32xf32>
    %128 = arith.truncf %127 : vector<8x32xf32> to vector<8x32xbf16>
    %c40_40 = arith.constant 40 : index
    %c0_41 = arith.constant 0 : index
    %129 = vector.load %arg13[%c40_40, %c0_41] : memref<64x32xbf16, #tpu.memory_space<vmem>>, vector<8x32xbf16>
    tpu.vector_store %arg13[%c40_40, %c0_41], %128 {strides = array<i32>} : memref<64x32xbf16, #tpu.memory_space<vmem>>, vector<8x32xbf16>,
    %c48 = arith.constant 48 : index
    %c0_42 = arith.constant 0 : index
    %130 = vector.load %arg12[%c48, %c0_42] : memref<64x128xf32, #tpu.memory_space<vmem>>, vector<8x128xf32>
    %cst_43 = arith.constant dense<0.000000e+00> : vector<8x128xf32>
    %131 = tpu.matmul %128, %7, %cst_43 {dimension_numbers = #tpu.dot_dimension_numbers<[1], [0], [0], [1], [0, 0, 1, 1], [], []>} : vector<8x32xbf16>, vector<32x128xbf16>, vector<8x128xf32> -> vector<8x128xf32>
    %132 = arith.addf %130, %131 : vector<8x128xf32>
    %133 = arith.negf %132 : vector<8x128xf32>
    %134 = math.exp %133 : vector<8x128xf32>
    %cst_44 = arith.constant 1.000000e+00 : f32
    %135 = vector.broadcast %cst_44 : f32 to vector<8x128xf32>
    %136 = arith.addf %135, %134 : vector<8x128xf32>
    %137 = arith.divf %135, %136 : vector<8x128xf32>
    %138 = vector.extract_strided_slice %137 {offsets = [0, 0], sizes = [8, 32], strides = [1, 1]} : vector<8x128xf32> to vector<8x32xf32>
    %139 = vector.extract_strided_slice %137 {offsets = [0, 32], sizes = [8, 32], strides = [1, 1]} : vector<8x128xf32> to vector<8x32xf32>
    %140 = vector.extract_strided_slice %137 {offsets = [0, 96], sizes = [8, 32], strides = [1, 1]} : vector<8x128xf32> to vector<8x32xf32>
    %141 = vector.extract_strided_slice %132 {offsets = [0, 64], sizes = [8, 32], strides = [1, 1]} : vector<8x128xf32> to vector<8x32xf32>
    %142 = math.tanh %141 : vector<8x32xf32>
    %143 = arith.mulf %139, %125 : vector<8x32xf32>
    %144 = arith.mulf %138, %142 : vector<8x32xf32>
    %145 = arith.addf %143, %144 : vector<8x32xf32>
    %146 = math.tanh %145 : vector<8x32xf32>
    %147 = arith.mulf %140, %146 : vector<8x32xf32>
    %148 = arith.truncf %147 : vector<8x32xf32> to vector<8x32xbf16>
    %c48_45 = arith.constant 48 : index
    %c0_46 = arith.constant 0 : index
    %149 = vector.load %arg13[%c48_45, %c0_46] : memref<64x32xbf16, #tpu.memory_space<vmem>>, vector<8x32xbf16>
    tpu.vector_store %arg13[%c48_45, %c0_46], %148 {strides = array<i32>} : memref<64x32xbf16, #tpu.memory_space<vmem>>, vector<8x32xbf16>,
    %c56 = arith.constant 56 : index
    %c0_47 = arith.constant 0 : index
    %150 = vector.load %arg12[%c56, %c0_47] : memref<64x128xf32, #tpu.memory_space<vmem>>, vector<8x128xf32>
    %cst_48 = arith.constant dense<0.000000e+00> : vector<8x128xf32>
    %151 = tpu.matmul %148, %7, %cst_48 {dimension_numbers = #tpu.dot_dimension_numbers<[1], [0], [0], [1], [0, 0, 1, 1], [], []>} : vector<8x32xbf16>, vector<32x128xbf16>, vector<8x128xf32> -> vector<8x128xf32>
    %152 = arith.addf %150, %151 : vector<8x128xf32>
    %153 = arith.negf %152 : vector<8x128xf32>
    %154 = math.exp %153 : vector<8x128xf32>
    %cst_49 = arith.constant 1.000000e+00 : f32
    %155 = vector.broadcast %cst_49 : f32 to vector<8x128xf32>
    %156 = arith.addf %155, %154 : vector<8x128xf32>
    %157 = arith.divf %155, %156 : vector<8x128xf32>
    %158 = vector.extract_strided_slice %157 {offsets = [0, 0], sizes = [8, 32], strides = [1, 1]} : vector<8x128xf32> to vector<8x32xf32>
    %159 = vector.extract_strided_slice %157 {offsets = [0, 32], sizes = [8, 32], strides = [1, 1]} : vector<8x128xf32> to vector<8x32xf32>
    %160 = vector.extract_strided_slice %157 {offsets = [0, 96], sizes = [8, 32], strides = [1, 1]} : vector<8x128xf32> to vector<8x32xf32>
    %161 = vector.extract_strided_slice %152 {offsets = [0, 64], sizes = [8, 32], strides = [1, 1]} : vector<8x128xf32> to vector<8x32xf32>
    %162 = math.tanh %161 : vector<8x32xf32>
    %163 = arith.mulf %159, %145 : vector<8x32xf32>
    %164 = arith.mulf %158, %162 : vector<8x32xf32>
    %165 = arith.addf %163, %164 : vector<8x32xf32>
    %166 = math.tanh %165 : vector<8x32xf32>
    %167 = arith.mulf %160, %166 : vector<8x32xf32>
    %168 = arith.truncf %167 : vector<8x32xf32> to vector<8x32xbf16>
    %c56_50 = arith.constant 56 : index
    %c0_51 = arith.constant 0 : index
    %169 = vector.load %arg13[%c56_50, %c0_51] : memref<64x32xbf16, #tpu.memory_space<vmem>>, vector<8x32xbf16>
    tpu.vector_store %arg13[%c56_50, %c0_51], %168 {strides = array<i32>} : memref<64x32xbf16, #tpu.memory_space<vmem>>, vector<8x32xbf16>,
    %c0_52 = arith.constant 0 : index
    %c0_53 = arith.constant 0 : index
    %170 = vector.load %arg13[%c0_52, %c0_53] : memref<64x32xbf16, #tpu.memory_space<vmem>>, vector<64x32xbf16>
    %c0_54 = arith.constant 0 : index
    %c0_55 = arith.constant 0 : index
    %171 = vector.load %arg4[%c0_54, %c0_55] : memref<32x128xbf16, #tpu.memory_space<vmem>>, vector<32x128xbf16>
    %cst_56 = arith.constant dense<0.000000e+00> : vector<64x128xf32>
    %172 = tpu.matmul %170, %171, %cst_56 {dimension_numbers = #tpu.dot_dimension_numbers<[1], [0], [0], [1], [0, 0, 1, 1], [], []>} : vector<64x32xbf16>, vector<32x128xbf16>, vector<64x128xf32> -> vector<64x128xf32>
    %c0_57 = arith.constant 0 : index
    %c0_58 = arith.constant 0 : index
    %173 = vector.load %arg6[%c0_57, %c0_58] : memref<1x128xf32, #tpu.memory_space<vmem>>, vector<1x128xf32>
    %174 = vector.broadcast %173 : vector<1x128xf32> to vector<64x128xf32>
    %175 = arith.addf %172, %174 : vector<64x128xf32>
    %c0_59 = arith.constant 0 : index
    %c0_60 = arith.constant 0 : index
    %176 = vector.load %arg12[%c0_59, %c0_60] : memref<64x128xf32, #tpu.memory_space<vmem>>, vector<64x128xf32>
    tpu.vector_store %arg12[%c0_59, %c0_60], %175 {strides = array<i32>} : memref<64x128xf32, #tpu.memory_space<vmem>>, vector<64x128xf32>,
    %c0_61 = arith.constant 0 : index
    %c0_62 = arith.constant 0 : index
    %177 = vector.load %arg5[%c0_61, %c0_62] : memref<32x128xbf16, #tpu.memory_space<vmem>>, vector<32x128xbf16>
    %cst_63 = arith.constant 0.000000e+00 : f32
    %178 = vector.broadcast %cst_63 : f32 to vector<8x32xf32>
    %cst_64 = arith.constant 0.000000e+00 : bf16
    %179 = vector.broadcast %cst_64 : bf16 to vector<8x32xbf16>
    %c0_65 = arith.constant 0 : index
    %c0_66 = arith.constant 0 : index
    %180 = vector.load %arg12[%c0_65, %c0_66] : memref<64x128xf32, #tpu.memory_space<vmem>>, vector<8x128xf32>
    %cst_67 = arith.constant dense<0.000000e+00> : vector<8x128xf32>
    %181 = tpu.matmul %179, %177, %cst_67 {dimension_numbers = #tpu.dot_dimension_numbers<[1], [0], [0], [1], [0, 0, 1, 1], [], []>} : vector<8x32xbf16>, vector<32x128xbf16>, vector<8x128xf32> -> vector<8x128xf32>
    %182 = arith.addf %180, %181 : vector<8x128xf32>
    %183 = arith.negf %182 : vector<8x128xf32>
    %184 = math.exp %183 : vector<8x128xf32>
    %cst_68 = arith.constant 1.000000e+00 : f32
    %185 = vector.broadcast %cst_68 : f32 to vector<8x128xf32>
    %186 = arith.addf %185, %184 : vector<8x128xf32>
    %187 = arith.divf %185, %186 : vector<8x128xf32>
    %188 = vector.extract_strided_slice %187 {offsets = [0, 0], sizes = [8, 32], strides = [1, 1]} : vector<8x128xf32> to vector<8x32xf32>
    %189 = vector.extract_strided_slice %187 {offsets = [0, 32], sizes = [8, 32], strides = [1, 1]} : vector<8x128xf32> to vector<8x32xf32>
    %190 = vector.extract_strided_slice %187 {offsets = [0, 96], sizes = [8, 32], strides = [1, 1]} : vector<8x128xf32> to vector<8x32xf32>
    %191 = vector.extract_strided_slice %182 {offsets = [0, 64], sizes = [8, 32], strides = [1, 1]} : vector<8x128xf32> to vector<8x32xf32>
    %192 = math.tanh %191 : vector<8x32xf32>
    %193 = arith.mulf %189, %178 : vector<8x32xf32>
    %194 = arith.mulf %188, %192 : vector<8x32xf32>
    %195 = arith.addf %193, %194 : vector<8x32xf32>
    %196 = math.tanh %195 : vector<8x32xf32>
    %197 = arith.mulf %190, %196 : vector<8x32xf32>
    %198 = arith.truncf %197 : vector<8x32xf32> to vector<8x32xbf16>
    %c8_69 = arith.constant 8 : index
    %c0_70 = arith.constant 0 : index
    %199 = vector.load %arg12[%c8_69, %c0_70] : memref<64x128xf32, #tpu.memory_space<vmem>>, vector<8x128xf32>
    %cst_71 = arith.constant dense<0.000000e+00> : vector<8x128xf32>
    %200 = tpu.matmul %198, %177, %cst_71 {dimension_numbers = #tpu.dot_dimension_numbers<[1], [0], [0], [1], [0, 0, 1, 1], [], []>} : vector<8x32xbf16>, vector<32x128xbf16>, vector<8x128xf32> -> vector<8x128xf32>
    %201 = arith.addf %199, %200 : vector<8x128xf32>
    %202 = arith.negf %201 : vector<8x128xf32>
    %203 = math.exp %202 : vector<8x128xf32>
    %cst_72 = arith.constant 1.000000e+00 : f32
    %204 = vector.broadcast %cst_72 : f32 to vector<8x128xf32>
    %205 = arith.addf %204, %203 : vector<8x128xf32>
    %206 = arith.divf %204, %205 : vector<8x128xf32>
    %207 = vector.extract_strided_slice %206 {offsets = [0, 0], sizes = [8, 32], strides = [1, 1]} : vector<8x128xf32> to vector<8x32xf32>
    %208 = vector.extract_strided_slice %206 {offsets = [0, 32], sizes = [8, 32], strides = [1, 1]} : vector<8x128xf32> to vector<8x32xf32>
    %209 = vector.extract_strided_slice %206 {offsets = [0, 96], sizes = [8, 32], strides = [1, 1]} : vector<8x128xf32> to vector<8x32xf32>
    %210 = vector.extract_strided_slice %201 {offsets = [0, 64], sizes = [8, 32], strides = [1, 1]} : vector<8x128xf32> to vector<8x32xf32>
    %211 = math.tanh %210 : vector<8x32xf32>
    %212 = arith.mulf %208, %195 : vector<8x32xf32>
    %213 = arith.mulf %207, %211 : vector<8x32xf32>
    %214 = arith.addf %212, %213 : vector<8x32xf32>
    %215 = math.tanh %214 : vector<8x32xf32>
    %216 = arith.mulf %209, %215 : vector<8x32xf32>
    %217 = arith.truncf %216 : vector<8x32xf32> to vector<8x32xbf16>
    %c16_73 = arith.constant 16 : index
    %c0_74 = arith.constant 0 : index
    %218 = vector.load %arg12[%c16_73, %c0_74] : memref<64x128xf32, #tpu.memory_space<vmem>>, vector<8x128xf32>
    %cst_75 = arith.constant dense<0.000000e+00> : vector<8x128xf32>
    %219 = tpu.matmul %217, %177, %cst_75 {dimension_numbers = #tpu.dot_dimension_numbers<[1], [0], [0], [1], [0, 0, 1, 1], [], []>} : vector<8x32xbf16>, vector<32x128xbf16>, vector<8x128xf32> -> vector<8x128xf32>
    %220 = arith.addf %218, %219 : vector<8x128xf32>
    %221 = arith.negf %220 : vector<8x128xf32>
    %222 = math.exp %221 : vector<8x128xf32>
    %cst_76 = arith.constant 1.000000e+00 : f32
    %223 = vector.broadcast %cst_76 : f32 to vector<8x128xf32>
    %224 = arith.addf %223, %222 : vector<8x128xf32>
    %225 = arith.divf %223, %224 : vector<8x128xf32>
    %226 = vector.extract_strided_slice %225 {offsets = [0, 0], sizes = [8, 32], strides = [1, 1]} : vector<8x128xf32> to vector<8x32xf32>
    %227 = vector.extract_strided_slice %225 {offsets = [0, 32], sizes = [8, 32], strides = [1, 1]} : vector<8x128xf32> to vector<8x32xf32>
    %228 = vector.extract_strided_slice %225 {offsets = [0, 96], sizes = [8, 32], strides = [1, 1]} : vector<8x128xf32> to vector<8x32xf32>
    %229 = vector.extract_strided_slice %220 {offsets = [0, 64], sizes = [8, 32], strides = [1, 1]} : vector<8x128xf32> to vector<8x32xf32>
    %230 = math.tanh %229 : vector<8x32xf32>
    %231 = arith.mulf %227, %214 : vector<8x32xf32>
    %232 = arith.mulf %226, %230 : vector<8x32xf32>
    %233 = arith.addf %231, %232 : vector<8x32xf32>
    %234 = math.tanh %233 : vector<8x32xf32>
    %235 = arith.mulf %228, %234 : vector<8x32xf32>
    %236 = arith.truncf %235 : vector<8x32xf32> to vector<8x32xbf16>
    %c24_77 = arith.constant 24 : index
    %c0_78 = arith.constant 0 : index
    %237 = vector.load %arg12[%c24_77, %c0_78] : memref<64x128xf32, #tpu.memory_space<vmem>>, vector<8x128xf32>
    %cst_79 = arith.constant dense<0.000000e+00> : vector<8x128xf32>
    %238 = tpu.matmul %236, %177, %cst_79 {dimension_numbers = #tpu.dot_dimension_numbers<[1], [0], [0], [1], [0, 0, 1, 1], [], []>} : vector<8x32xbf16>, vector<32x128xbf16>, vector<8x128xf32> -> vector<8x128xf32>
    %239 = arith.addf %237, %238 : vector<8x128xf32>
    %240 = arith.negf %239 : vector<8x128xf32>
    %241 = math.exp %240 : vector<8x128xf32>
    %cst_80 = arith.constant 1.000000e+00 : f32
    %242 = vector.broadcast %cst_80 : f32 to vector<8x128xf32>
    %243 = arith.addf %242, %241 : vector<8x128xf32>
    %244 = arith.divf %242, %243 : vector<8x128xf32>
    %245 = vector.extract_strided_slice %244 {offsets = [0, 0], sizes = [8, 32], strides = [1, 1]} : vector<8x128xf32> to vector<8x32xf32>
    %246 = vector.extract_strided_slice %244 {offsets = [0, 32], sizes = [8, 32], strides = [1, 1]} : vector<8x128xf32> to vector<8x32xf32>
    %247 = vector.extract_strided_slice %244 {offsets = [0, 96], sizes = [8, 32], strides = [1, 1]} : vector<8x128xf32> to vector<8x32xf32>
    %248 = vector.extract_strided_slice %239 {offsets = [0, 64], sizes = [8, 32], strides = [1, 1]} : vector<8x128xf32> to vector<8x32xf32>
    %249 = math.tanh %248 : vector<8x32xf32>
    %250 = arith.mulf %246, %233 : vector<8x32xf32>
    %251 = arith.mulf %245, %249 : vector<8x32xf32>
    %252 = arith.addf %250, %251 : vector<8x32xf32>
    %253 = math.tanh %252 : vector<8x32xf32>
    %254 = arith.mulf %247, %253 : vector<8x32xf32>
    %255 = arith.truncf %254 : vector<8x32xf32> to vector<8x32xbf16>
    %c32_81 = arith.constant 32 : index
    %c0_82 = arith.constant 0 : index
    %256 = vector.load %arg12[%c32_81, %c0_82] : memref<64x128xf32, #tpu.memory_space<vmem>>, vector<8x128xf32>
    %cst_83 = arith.constant dense<0.000000e+00> : vector<8x128xf32>
    %257 = tpu.matmul %255, %177, %cst_83 {dimension_numbers = #tpu.dot_dimension_numbers<[1], [0], [0], [1], [0, 0, 1, 1], [], []>} : vector<8x32xbf16>, vector<32x128xbf16>, vector<8x128xf32> -> vector<8x128xf32>
    %258 = arith.addf %256, %257 : vector<8x128xf32>
    %259 = arith.negf %258 : vector<8x128xf32>
    %260 = math.exp %259 : vector<8x128xf32>
    %cst_84 = arith.constant 1.000000e+00 : f32
    %261 = vector.broadcast %cst_84 : f32 to vector<8x128xf32>
    %262 = arith.addf %261, %260 : vector<8x128xf32>
    %263 = arith.divf %261, %262 : vector<8x128xf32>
    %264 = vector.extract_strided_slice %263 {offsets = [0, 0], sizes = [8, 32], strides = [1, 1]} : vector<8x128xf32> to vector<8x32xf32>
    %265 = vector.extract_strided_slice %263 {offsets = [0, 32], sizes = [8, 32], strides = [1, 1]} : vector<8x128xf32> to vector<8x32xf32>
    %266 = vector.extract_strided_slice %263 {offsets = [0, 96], sizes = [8, 32], strides = [1, 1]} : vector<8x128xf32> to vector<8x32xf32>
    %267 = vector.extract_strided_slice %258 {offsets = [0, 64], sizes = [8, 32], strides = [1, 1]} : vector<8x128xf32> to vector<8x32xf32>
    %268 = math.tanh %267 : vector<8x32xf32>
    %269 = arith.mulf %265, %252 : vector<8x32xf32>
    %270 = arith.mulf %264, %268 : vector<8x32xf32>
    %271 = arith.addf %269, %270 : vector<8x32xf32>
    %272 = math.tanh %271 : vector<8x32xf32>
    %273 = arith.mulf %266, %272 : vector<8x32xf32>
    %274 = arith.truncf %273 : vector<8x32xf32> to vector<8x32xbf16>
    %c40_85 = arith.constant 40 : index
    %c0_86 = arith.constant 0 : index
    %275 = vector.load %arg12[%c40_85, %c0_86] : memref<64x128xf32, #tpu.memory_space<vmem>>, vector<8x128xf32>
    %cst_87 = arith.constant dense<0.000000e+00> : vector<8x128xf32>
    %276 = tpu.matmul %274, %177, %cst_87 {dimension_numbers = #tpu.dot_dimension_numbers<[1], [0], [0], [1], [0, 0, 1, 1], [], []>} : vector<8x32xbf16>, vector<32x128xbf16>, vector<8x128xf32> -> vector<8x128xf32>
    %277 = arith.addf %275, %276 : vector<8x128xf32>
    %278 = arith.negf %277 : vector<8x128xf32>
    %279 = math.exp %278 : vector<8x128xf32>
    %cst_88 = arith.constant 1.000000e+00 : f32
    %280 = vector.broadcast %cst_88 : f32 to vector<8x128xf32>
    %281 = arith.addf %280, %279 : vector<8x128xf32>
    %282 = arith.divf %280, %281 : vector<8x128xf32>
    %283 = vector.extract_strided_slice %282 {offsets = [0, 0], sizes = [8, 32], strides = [1, 1]} : vector<8x128xf32> to vector<8x32xf32>
    %284 = vector.extract_strided_slice %282 {offsets = [0, 32], sizes = [8, 32], strides = [1, 1]} : vector<8x128xf32> to vector<8x32xf32>
    %285 = vector.extract_strided_slice %282 {offsets = [0, 96], sizes = [8, 32], strides = [1, 1]} : vector<8x128xf32> to vector<8x32xf32>
    %286 = vector.extract_strided_slice %277 {offsets = [0, 64], sizes = [8, 32], strides = [1, 1]} : vector<8x128xf32> to vector<8x32xf32>
    %287 = math.tanh %286 : vector<8x32xf32>
    %288 = arith.mulf %284, %271 : vector<8x32xf32>
    %289 = arith.mulf %283, %287 : vector<8x32xf32>
    %290 = arith.addf %288, %289 : vector<8x32xf32>
    %291 = math.tanh %290 : vector<8x32xf32>
    %292 = arith.mulf %285, %291 : vector<8x32xf32>
    %293 = arith.truncf %292 : vector<8x32xf32> to vector<8x32xbf16>
    %c48_89 = arith.constant 48 : index
    %c0_90 = arith.constant 0 : index
    %294 = vector.load %arg12[%c48_89, %c0_90] : memref<64x128xf32, #tpu.memory_space<vmem>>, vector<8x128xf32>
    %cst_91 = arith.constant dense<0.000000e+00> : vector<8x128xf32>
    %295 = tpu.matmul %293, %177, %cst_91 {dimension_numbers = #tpu.dot_dimension_numbers<[1], [0], [0], [1], [0, 0, 1, 1], [], []>} : vector<8x32xbf16>, vector<32x128xbf16>, vector<8x128xf32> -> vector<8x128xf32>
    %296 = arith.addf %294, %295 : vector<8x128xf32>
    %297 = arith.negf %296 : vector<8x128xf32>
    %298 = math.exp %297 : vector<8x128xf32>
    %cst_92 = arith.constant 1.000000e+00 : f32
    %299 = vector.broadcast %cst_92 : f32 to vector<8x128xf32>
    %300 = arith.addf %299, %298 : vector<8x128xf32>
    %301 = arith.divf %299, %300 : vector<8x128xf32>
    %302 = vector.extract_strided_slice %301 {offsets = [0, 0], sizes = [8, 32], strides = [1, 1]} : vector<8x128xf32> to vector<8x32xf32>
    %303 = vector.extract_strided_slice %301 {offsets = [0, 32], sizes = [8, 32], strides = [1, 1]} : vector<8x128xf32> to vector<8x32xf32>
    %304 = vector.extract_strided_slice %301 {offsets = [0, 96], sizes = [8, 32], strides = [1, 1]} : vector<8x128xf32> to vector<8x32xf32>
    %305 = vector.extract_strided_slice %296 {offsets = [0, 64], sizes = [8, 32], strides = [1, 1]} : vector<8x128xf32> to vector<8x32xf32>
    %306 = math.tanh %305 : vector<8x32xf32>
    %307 = arith.mulf %303, %290 : vector<8x32xf32>
    %308 = arith.mulf %302, %306 : vector<8x32xf32>
    %309 = arith.addf %307, %308 : vector<8x32xf32>
    %310 = math.tanh %309 : vector<8x32xf32>
    %311 = arith.mulf %304, %310 : vector<8x32xf32>
    %312 = arith.truncf %311 : vector<8x32xf32> to vector<8x32xbf16>
    %c56_93 = arith.constant 56 : index
    %c0_94 = arith.constant 0 : index
    %313 = vector.load %arg12[%c56_93, %c0_94] : memref<64x128xf32, #tpu.memory_space<vmem>>, vector<8x128xf32>
    %cst_95 = arith.constant dense<0.000000e+00> : vector<8x128xf32>
    %314 = tpu.matmul %312, %177, %cst_95 {dimension_numbers = #tpu.dot_dimension_numbers<[1], [0], [0], [1], [0, 0, 1, 1], [], []>} : vector<8x32xbf16>, vector<32x128xbf16>, vector<8x128xf32> -> vector<8x128xf32>
    %315 = arith.addf %313, %314 : vector<8x128xf32>
    %316 = arith.negf %315 : vector<8x128xf32>
    %317 = math.exp %316 : vector<8x128xf32>
    %cst_96 = arith.constant 1.000000e+00 : f32
    %318 = vector.broadcast %cst_96 : f32 to vector<8x128xf32>
    %319 = arith.addf %318, %317 : vector<8x128xf32>
    %320 = arith.divf %318, %319 : vector<8x128xf32>
    %321 = vector.extract_strided_slice %320 {offsets = [0, 0], sizes = [8, 32], strides = [1, 1]} : vector<8x128xf32> to vector<8x32xf32>
    %322 = vector.extract_strided_slice %320 {offsets = [0, 32], sizes = [8, 32], strides = [1, 1]} : vector<8x128xf32> to vector<8x32xf32>
    %323 = vector.extract_strided_slice %320 {offsets = [0, 96], sizes = [8, 32], strides = [1, 1]} : vector<8x128xf32> to vector<8x32xf32>
    %324 = vector.extract_strided_slice %315 {offsets = [0, 64], sizes = [8, 32], strides = [1, 1]} : vector<8x128xf32> to vector<8x32xf32>
    %325 = math.tanh %324 : vector<8x32xf32>
    %326 = arith.mulf %322, %309 : vector<8x32xf32>
    %327 = arith.mulf %321, %325 : vector<8x32xf32>
    %328 = arith.addf %326, %327 : vector<8x32xf32>
    %329 = math.tanh %328 : vector<8x32xf32>
    %330 = arith.mulf %323, %329 : vector<8x32xf32>
    %331 = arith.truncf %330 : vector<8x32xf32> to vector<8x32xbf16>
    %c0_97 = arith.constant 0 : index
    %c0_98 = arith.constant 0 : index
    %332 = vector.load %arg7[%c0_97, %c0_98] : memref<32x64xbf16, #tpu.memory_space<vmem>>, vector<32x64xbf16>
    %cst_99 = arith.constant dense<0.000000e+00> : vector<8x64xf32>
    %333 = tpu.matmul %331, %332, %cst_99 {dimension_numbers = #tpu.dot_dimension_numbers<[1], [0], [0], [1], [0, 0, 1, 1], [], []>} : vector<8x32xbf16>, vector<32x64xbf16>, vector<8x64xf32> -> vector<8x64xf32>
    %c0_100 = arith.constant 0 : index
    %c0_101 = arith.constant 0 : index
    %334 = vector.load %arg8[%c0_100, %c0_101] : memref<1x64xf32, #tpu.memory_space<vmem>>, vector<1x64xf32>
    %335 = vector.broadcast %334 : vector<1x64xf32> to vector<8x64xf32>
    %336 = arith.addf %333, %335 : vector<8x64xf32>
    %cst_102 = arith.constant 0.000000e+00 : f32
    %337 = vector.broadcast %cst_102 : f32 to vector<8x64xf32>
    %338 = arith.maximumf %336, %337 : vector<8x64xf32>
    %c0_103 = arith.constant 0 : index
    %c0_104 = arith.constant 0 : index
    %339 = vector.load %arg9[%c0_103, %c0_104] : memref<1x64xf32, #tpu.memory_space<vmem>>, vector<1x64xf32>
    %340 = vector.broadcast %339 : vector<1x64xf32> to vector<8x64xf32>
    %341 = arith.mulf %338, %340 : vector<8x64xf32>
    %cst_105 = arith.constant dense<0.000000e+00> : vector<8xf32>
    %342 = vector.multi_reduction <add>, %341, %cst_105 [1] : vector<8x64xf32> to vector<8xf32>
    %343 = vector.shape_cast %342 : vector<8xf32> to vector<8x1xf32>
    %c0_106 = arith.constant 0 : index
    %c0_107 = arith.constant 0 : index
    %344 = vector.load %arg10[%c0_106, %c0_107] : memref<1x1xf32, #tpu.memory_space<vmem>>, vector<1x1xf32>
    %345 = vector.broadcast %344 : vector<1x1xf32> to vector<8x1xf32>
    %346 = arith.addf %343, %345 : vector<8x1xf32>
    %c0_108 = arith.constant 0 : index
    %c0_109 = arith.constant 0 : index
    %347 = vector.load %arg11[%c0_108, %c0_109] : memref<8x1xf32, #tpu.memory_space<vmem>>, vector<8x1xf32>
    tpu.vector_store %arg11[%c0_108, %c0_109], %346 {strides = array<i32>} : memref<8x1xf32, #tpu.memory_space<vmem>>, vector<8x1xf32>,
    return
  }
}

</mosaic_0001>

<llo_original>
// kernel: sol_price_lstm_forward.1
$region0: #{sol_price_lstm_forward.1}
  #allocation0 [shape = 'u32[]', space=smem, size = 0x4, offset = 0x4, fixed_abs, tag = 'smem constant byte address 0x4 - core index']
  #allocation1 [shape = 'u32[144,128]{1,0:T(1,128)}', space=vmem, size = 0x12000, scoped, tag = 'internal scratch']
  #allocation2 [shape = 'f32[64,128]{1,0:T(8,128)}', space=vmem, size = 0x8000, scoped, tag = 'scratch operand']
  #allocation3 [shape = 'bf16[64,32]{1,0:T(16,128)(2,1)}', space=vmem, size = 0x4000, scoped, tag = 'scratch operand']
  #allocation4 [shape = 'f32[1,1]{1,0:T(1,128)S(1)}', space=vmem, size = 0x200, scoped, tag = 'scoped memory for sol_price_lstm_forward.1']
  %s0 = inlined_call_operand.vmem [shape: bf16[64,8], index: 0, kind: input, shape index: {}]
  %s1 = inlined_call_operand.vmem [shape: bf16[8,128], index: 1, kind: input, shape index: {}]
  %s2 = inlined_call_operand.vmem [shape: bf16[32,128], index: 2, kind: input, shape index: {}]
  %s3 = inlined_call_operand.vmem [shape: f32[1,128], index: 3, kind: input, shape index: {}]
  %s4 = inlined_call_operand.vmem [shape: bf16[32,128], index: 4, kind: input, shape index: {}]
  %s5 = inlined_call_operand.vmem [shape: bf16[32,128], index: 5, kind: input, shape index: {}]
  %s6 = inlined_call_operand.vmem [shape: f32[1,128], index: 6, kind: input, shape index: {}]
  %s7 = inlined_call_operand.vmem [shape: bf16[32,64], index: 7, kind: input, shape index: {}]
  %s8 = inlined_call_operand.vmem [shape: f32[1,64], index: 8, kind: input, shape index: {}]
  %s9 = inlined_call_operand.vmem [shape: f32[1,64], index: 9, kind: input, shape index: {}]
  %s10 = inlined_call_operand.<no memory space> [shape: f32[1,1], index: 10, kind: input, shape index: {}]
  %s11 = inlined_call_operand.vmem [shape: f32[8,1], index: 11, kind: output, shape index: {}]
  %s12 = sld [smem:[#allocation0]]
  $region54: #{sol_price_lstm_forward.1} parent=0
    _
  %s14 = ssub.s32 1, %s12
  %s15 = scalar_select 0, %s14, %s12
  %v16 = vstv %s10
  %17 = vst [vmem:[#allocation4] sm:$0x1] %v16
  // Predicated region
  $region2: #{sol_price_lstm_forward.1} parent=0 // pred_check
    _
  $region3: #{sol_price_lstm_forward.1} parent=0 // pred_check_branch
    %19 = sbr.rel (0) target = $region5
  $region4: #{sol_price_lstm_forward.1} parent=0 // pred_region
    _
  $region5: #{sol_price_lstm_forward.1} parent=0 // pred_fallthru
    _
  // Predicated region
  $region6: #{sol_price_lstm_forward.1} parent=0 // pred_check
    _
  $region7: #{sol_price_lstm_forward.1} parent=0 // pred_check_branch
    %21 = sbr.rel (0) target = $region9
  $region8: #{sol_price_lstm_forward.1} parent=0 // pred_region
    _
  $region9: #{sol_price_lstm_forward.1} parent=0 // pred_fallthru
    _
  // Predicated region
  $region10: #{sol_price_lstm_forward.1} parent=0 // pred_check
    _
  $region11: #{sol_price_lstm_forward.1} parent=0 // pred_check_branch
    %23 = sbr.rel (0) target = $region13
  $region12: #{sol_price_lstm_forward.1} parent=0 // pred_region
    _
  $region13: #{sol_price_lstm_forward.1} parent=0 // pred_fallthru
    _
  // Predicated region
  $region14: #{sol_price_lstm_forward.1} parent=0 // pred_check
    _
  $region15: #{sol_price_lstm_forward.1} parent=0 // pred_check_branch
    %25 = sbr.rel (0) target = $region17
  $region16: #{sol_price_lstm_forward.1} parent=0 // pred_region
    _
  $region17: #{sol_price_lstm_forward.1} parent=0 // pred_fallthru
    _
  // Predicated region
  $region18: #{sol_price_lstm_forward.1} parent=0 // pred_check
    _
  $region19: #{sol_price_lstm_forward.1} parent=0 // pred_check_branch
    %27 = sbr.rel (0) target = $region21
  $region20: #{sol_price_lstm_forward.1} parent=0 // pred_region
    _
  $region21: #{sol_price_lstm_forward.1} parent=0 // pred_fallthru
    _
  // Predicated region
  $region22: #{sol_price_lstm_forward.1} parent=0 // pred_check
    _
  $region23: #{sol_price_lstm_forward.1} parent=0 // pred_check_branch
    %29 = sbr.rel (0) target = $region25
  $region24: #{sol_price_lstm_forward.1} parent=0 // pred_region
    _
  $region25: #{sol_price_lstm_forward.1} parent=0 // pred_fallthru
    _
  // Predicated region
  $region26: #{sol_price_lstm_forward.1} parent=0 // pred_check
    _
  $region27: #{sol_price_lstm_forward.1} parent=0 // pred_check_branch
    %31 = sbr.rel (0) target = $region29
  $region28: #{sol_price_lstm_forward.1} parent=0 // pred_region
    _
  $region29: #{sol_price_lstm_forward.1} parent=0 // pred_fallthru
    _
  // Predicated region
  $region30: #{sol_price_lstm_forward.1} parent=0 // pred_check
    _
  $region31: #{sol_price_lstm_forward.1} parent=0 // pred_check_branch
    %33 = sbr.rel (0) target = $region33
  $region32: #{sol_price_lstm_forward.1} parent=0 // pred_region
    _
  $region33: #{sol_price_lstm_forward.1} parent=0 // pred_fallthru
    _
  // Predicated region
  $region34: #{sol_price_lstm_forward.1} parent=0 // pred_check
    _
  $region35: #{sol_price_lstm_forward.1} parent=0 // pred_check_branch
    %35 = sbr.rel (0) target = $region37
  $region36: #{sol_price_lstm_forward.1} parent=0 // pred_region
    _
  $region37: #{sol_price_lstm_forward.1} parent=0 // pred_fallthru
    _
  // Predicated region
  $region38: #{sol_price_lstm_forward.1} parent=0 // pred_check
    _
  $region39: #{sol_price_lstm_forward.1} parent=0 // pred_check_branch
    %37 = sbr.rel (0) target = $region41
  $region40: #{sol_price_lstm_forward.1} parent=0 // pred_region
    _
  $region41: #{sol_price_lstm_forward.1} parent=0 // pred_fallthru
    _
  // Predicated region
  $region42: #{sol_price_lstm_forward.1} parent=0 // pred_check
    _
  $region43: #{sol_price_lstm_forward.1} parent=0 // pred_check_branch
    %39 = sbr.rel (0) target = $region45
  $region44: #{sol_price_lstm_forward.1} parent=0 // pred_region
    _
  $region45: #{sol_price_lstm_forward.1} parent=0 // pred_fallthru
    _
  %v41 = vld [vmem:[%s0] sm:$0xf]
  %v42 = vld [vmem:[%s0 + $0x4] sm:$0xf]
  %v43 = vld [vmem:[%s0 + $0x8] sm:$0xf]
  %v44 = vld [vmem:[%s0 + $0xc] sm:$0xf]
  %v45 = vld [vmem:[%s0 + $0x10] sm:$0xf]
  %v46 = vld [vmem:[%s0 + $0x14] sm:$0xf]
  %v47 = vld [vmem:[%s0 + $0x18] sm:$0xf]
  %v48 = vld [vmem:[%s0 + $0x1c] sm:$0xf]
  %v49 = vld [vmem:[%s1] sm:$0xf]
  %v50 = vld [vmem:[%s3] sm:$0x1]
  %v52 = vlaneseq
  %v53 = vshrl.u32 %v52, 7
  %v54 = vsub.s32 0, %v53
  %v55 = vrot.slane %v50, %v54
  %v65 = vunpack.c.l.b16 %v41
  %v66 = vunpack.c.l.b16 %v42
  %v67 = vunpack.c.l.b16 %v43
  %v68 = vunpack.c.l.b16 %v44
  %v69 = vunpack.c.l.b16 %v45
  %v70 = vunpack.c.l.b16 %v46
  %v71 = vunpack.c.l.b16 %v47
  %v72 = vunpack.c.l.b16 %v48
  %v73 = vpack.c.b16 %v66, %v65
  %v74 = vpack.c.b16 %v68, %v67
  %v75 = vpack.c.b16 %v70, %v69
  %v76 = vpack.c.b16 %v72, %v71
  %vm77 = vcmask 64512
  %v79 = vsel %vm77, %v73, 0
  %v82 = vsel %vm77, %v74, 0
  %v85 = vsel %vm77, %v75, 0
  %v88 = vsel %vm77, %v76, 0
  %vm90 = vcmask 1043456
  %v92 = vsel %vm90, %v49, 0
  %94 = vmatprep.subr.bf16.mxu0 0
  %95 = vmatpush1.bf16.msra.mxu0 %v92
  %96 = vmatprep.subr.bf16.mxu0 0
  %97 = vmatpush1.bf16.msra.mxu0 0
  %98 = vmatprep.subr.bf16.mxu0 0
  %99 = vmatpush1.bf16.msra.mxu0 0
  %100 = vmatprep.subr.bf16.mxu0 0
  %101 = vmatpush1.bf16.msra.mxu0 0
  %102 = vmatprep.subr.bf16.mxu0 0
  %103 = vmatpush1.bf16.msra.mxu0 0
  %104 = vmatprep.subr.bf16.mxu0 0
  %105 = vmatpush1.bf16.msra.mxu0 0
  %106 = vmatprep.subr.bf16.mxu0 0
  %107 = vmatpush1.bf16.msra.mxu0 0
  %108 = vmatprep.subr.bf16.mxu0 0
  %109 = vmatpush1.bf16.msra.mxu0 0
  %110 = vmatprep.subr.bf16.mxu0 0
  %111 = vmatpush1.bf16.msra.mxu0 0
  %112 = vmatprep.subr.bf16.mxu0 0
  %113 = vmatpush1.bf16.msra.mxu0 0
  %114 = vmatprep.subr.bf16.mxu0 0
  %115 = vmatpush1.bf16.msra.mxu0 0
  %116 = vmatprep.subr.bf16.mxu0 0
  %117 = vmatpush1.bf16.msra.mxu0 0
  %118 = vmatprep.subr.bf16.mxu0 0
  %119 = vmatpush1.bf16.msra.mxu0 0
  %120 = vmatprep.subr.bf16.mxu0 0
  %121 = vmatpush1.bf16.msra.mxu0 0
  %122 = vmatprep.subr.bf16.mxu0 0
  %123 = vmatpush1.bf16.msra.mxu0 0
  %124 = vmatprep.subr.bf16.mxu0 0
  %125 = vmatpush1.bf16.msra.mxu0 0
  %126 = vmatprep.mubr.bf16.mxu0 0
  %127 = vmatmul.mubr.bf16.gmra.mrb[0].mxu0 %v79
  %v128 = vpop.f32.mrb[0].mxu0
  %v129 = vadd.f32 %v55, %v128
  %v130 = vpop.f32.mrb[0].mxu0
  %v131 = vpop.f32.mrb[0].mxu0
  %v132 = vadd.f32 %v55, %v131
  %v133 = vpop.f32.mrb[0].mxu0
  %134 = vmatprep.mubr.bf16.mxu0 0
  %135 = vmatmul.mubr.bf16.gmra.mrb[0].mxu0 %v82
  %v136 = vpop.f32.mrb[0].mxu0
  %v137 = vadd.f32 %v55, %v136
  %v138 = vpop.f32.mrb[0].mxu0
  %v139 = vpop.f32.mrb[0].mxu0
  %v140 = vadd.f32 %v55, %v139
  %v141 = vpop.f32.mrb[0].mxu0
  %142 = vmatprep.mubr.bf16.mxu0 0
  %143 = vmatmul.mubr.bf16.gmra.mrb[0].mxu0 %v85
  %v144 = vpop.f32.mrb[0].mxu0
  %v145 = vadd.f32 %v55, %v144
  %v146 = vpop.f32.mrb[0].mxu0
  %v147 = vpop.f32.mrb[0].mxu0
  %v148 = vadd.f32 %v55, %v147
  %v149 = vpop.f32.mrb[0].mxu0
  %150 = vmatprep.mubr.bf16.mxu0 0
  %151 = vmatmul.mubr.bf16.gmra.mrb[0].mxu0 %v88
  %v152 = vpop.f32.mrb[0].mxu0
  %v153 = vadd.f32 %v55, %v152
  %v154 = vpop.f32.mrb[0].mxu0
  %v155 = vpop.f32.mrb[0].mxu0
  %v156 = vadd.f32 %v55, %v155
  %v157 = vpop.f32.mrb[0].mxu0
  %158 = vdwg.mxu0
  %159 = vst [vmem:[#allocation2] sm:$0xff] %v129
  %160 = vst [vmem:[#allocation2 + $0x8] sm:$0xff] %v132
  %161 = vst [vmem:[#allocation2 + $0x10] sm:$0xff] %v137
  %162 = vst [vmem:[#allocation2 + $0x18] sm:$0xff] %v140
  %163 = vst [vmem:[#allocation2 + $0x20] sm:$0xff] %v145
  %164 = vst [vmem:[#allocation2 + $0x28] sm:$0xff] %v148
  %165 = vst [vmem:[#allocation2 + $0x30] sm:$0xff] %v153
  %166 = vst [vmem:[#allocation2 + $0x38] sm:$0xff] %v156
  %v167 = vld [vmem:[%s2] sm:$0xf]
  %v168 = vld [vmem:[%s2 + $0x4] sm:$0xf]
  %v169 = vld [vmem:[%s2 + $0x8] sm:$0xf]
  %v170 = vld [vmem:[%s2 + $0xc] sm:$0xf]
  %v171 = vld [vmem:[#allocation2] sm:$0xff]
  %v176 = vunpack.c.l.b16 %v167
  %v177 = vunpack.c.l.b16 %v168
  %v178 = vunpack.c.l.b16 %v169
  %v179 = vunpack.c.l.b16 %v170
  %v180 = vpack.c.b16 %v177, %v176
  %v181 = vpack.c.b16 %v179, %v178
  %vm184 = vcmask 261120
  %v186 = vsel %vm184, 0, 0
  %188 = vmatprep.subr.bf16.mxu0 0
  %189 = vmatpush1.bf16.msra.mxu0 %v180
  %190 = vmatprep.subr.bf16.mxu0 0
  %191 = vmatpush1.bf16.msra.mxu0 %v181
  %192 = vmatprep.subr.bf16.mxu0 0
  %193 = vmatpush1.bf16.msra.mxu0 0
  %194 = vmatprep.subr.bf16.mxu0 0
  %195 = vmatpush1.bf16.msra.mxu0 0
  %196 = vmatprep.subr.bf16.mxu0 0
  %197 = vmatpush1.bf16.msra.mxu0 0
  %198 = vmatprep.subr.bf16.mxu0 0
  %199 = vmatpush1.bf16.msra.mxu0 0
  %200 = vmatprep.subr.bf16.mxu0 0
  %201 = vmatpush1.bf16.msra.mxu0 0
  %202 = vmatprep.subr.bf16.mxu0 0
  %203 = vmatpush1.bf16.msra.mxu0 0
  %204 = vmatprep.subr.bf16.mxu0 0
  %205 = vmatpush1.bf16.msra.mxu0 0
  %206 = vmatprep.subr.bf16.mxu0 0
  %207 = vmatpush1.bf16.msra.mxu0 0
  %208 = vmatprep.subr.bf16.mxu0 0
  %209 = vmatpush1.bf16.msra.mxu0 0
  %210 = vmatprep.subr.bf16.mxu0 0
  %211 = vmatpush1.bf16.msra.mxu0 0
  %212 = vmatprep.subr.bf16.mxu0 0
  %213 = vmatpush1.bf16.msra.mxu0 0
  %214 = vmatprep.subr.bf16.mxu0 0
  %215 = vmatpush1.bf16.msra.mxu0 0
  %216 = vmatprep.subr.bf16.mxu0 0
  %217 = vmatpush1.bf16.msra.mxu0 0
  %218 = vmatprep.subr.bf16.mxu0 0
  %219 = vmatpush1.bf16.msra.mxu0 0
  %220 = vmatprep.mubr.bf16.mxu0 0
  %221 = vmatmul.mubr.bf16.gmra.mrb[0].mxu0 %v186
  %v222 = vpop.f32.mrb[0].mxu0
  %v223 = vadd.f32 0.0, %v222
  %v224 = vpop.f32.mrb[0].mxu0
  %v225 = vpop.f32.mrb[0].mxu0
  %v226 = vpop.f32.mrb[0].mxu0
  %227 = vdwg.mxu0
  %v228 = vadd.f32 %v171, %v223
  %v229 = vxor.u32 %v228, 2147483648
  %v230 = vmul.f32 %v229, 1.442695
  %v231 = vpow.pop %v230
  %v232 = vadd.f32 %v231, 1.0
  %v233 = vrcp.pop %v232
  %v234 = vmul.f32 1.0, %v233
  %v235 = vtanh.pop %v228
  %v236 = vmul.f32 %v234, 0.0
  %238 = vrot.lane.b32.xlu0 %v235, 64
  %v239 = vpop.permute.xlu0 %238
  %v241 = vmul.f32 %v234, %v239
  %243 = vrot.lane.b32.xlu0 %v241, 32
  %v244 = vpop.permute.xlu0 %243
  %v246 = vadd.f32 %v236, %v244
  %v247 = vtanh.pop %v246
  %249 = vrot.lane.b32.xlu0 %v247, 64
  %v250 = vpop.permute.xlu0 %249
  %v252 = vmul.f32 %v234, %v250
  %v253 = vpack.c.bf16 %v252, %v252
  %255 = vrot.lane.b32.xlu0 %v253, 32
  %v256 = vpop.permute.xlu0 %255
  %vm258 = vcmask 257024
  %259 = vst.msk [vmem:[#allocation3] sm:$0xf] %vm258, %v256
  %v260 = vld [vmem:[#allocation2 + $0x8] sm:$0xff]
  %v262 = vsel %vm184, %v256, 0
  %264 = vmatprep.subr.bf16.mxu0 0
  %265 = vmatpush1.bf16.msra.mxu0 %v180
  %266 = vmatprep.subr.bf16.mxu0 0
  %267 = vmatpush1.bf16.msra.mxu0 %v181
  %268 = vmatprep.subr.bf16.mxu0 0
  %269 = vmatpush1.bf16.msra.mxu0 0
  %270 = vmatprep.subr.bf16.mxu0 0
  %271 = vmatpush1.bf16.msra.mxu0 0
  %272 = vmatprep.subr.bf16.mxu0 0
  %273 = vmatpush1.bf16.msra.mxu0 0
  %274 = vmatprep.subr.bf16.mxu0 0
  %275 = vmatpush1.bf16.msra.mxu0 0
  %276 = vmatprep.subr.bf16.mxu0 0
  %277 = vmatpush1.bf16.msra.mxu0 0
  %278 = vmatprep.subr.bf16.mxu0 0
  %279 = vmatpush1.bf16.msra.mxu0 0
  %280 = vmatprep.subr.bf16.mxu0 0
  %281 = vmatpush1.bf16.msra.mxu0 0
  %282 = vmatprep.subr.bf16.mxu0 0
  %283 = vmatpush1.bf16.msra.mxu0 0
  %284 = vmatprep.subr.bf16.mxu0 0
  %285 = vmatpush1.bf16.msra.mxu0 0
  %286 = vmatprep.subr.bf16.mxu0 0
  %287 = vmatpush1.bf16.msra.mxu0 0
  %288 = vmatprep.subr.bf16.mxu0 0
  %289 = vmatpush1.bf16.msra.mxu0 0
  %290 = vmatprep.subr.bf16.mxu0 0
  %291 = vmatpush1.bf16.msra.mxu0 0
  %292 = vmatprep.subr.bf16.mxu0 0
  %293 = vmatpush1.bf16.msra.mxu0 0
  %294 = vmatprep.subr.bf16.mxu0 0
  %295 = vmatpush1.bf16.msra.mxu0 0
  %296 = vmatprep.mubr.bf16.mxu0 0
  %297 = vmatmul.mubr.bf16.gmra.mrb[0].mxu0 %v262
  %v298 = vpop.f32.mrb[0].mxu0
  %v299 = vadd.f32 0.0, %v298
  %v300 = vpop.f32.mrb[0].mxu0
  %v301 = vpop.f32.mrb[0].mxu0
  %v302 = vpop.f32.mrb[0].mxu0
  %303 = vdwg.mxu0
  %v304 = vadd.f32 %v260, %v299
  %v305 = vxor.u32 %v304, 2147483648
  %v306 = vmul.f32 %v305, 1.442695
  %v307 = vpow.pop %v306
  %v308 = vadd.f32 %v307, 1.0
  %v309 = vrcp.pop %v308
  %v310 = vmul.f32 1.0, %v309
  %v311 = vtanh.pop %v304
  %v312 = vmul.f32 %v310, %v246
  %314 = vrot.lane.b32.xlu0 %v311, 64
  %v315 = vpop.permute.xlu0 %314
  %v317 = vmul.f32 %v310, %v315
  %319 = vrot.lane.b32.xlu0 %v317, 32
  %v320 = vpop.permute.xlu0 %319
  %v322 = vadd.f32 %v312, %v320
  %v323 = vtanh.pop %v322
  %325 = vrot.lane.b32.xlu0 %v323, 64
  %v326 = vpop.permute.xlu0 %325
  %v328 = vmul.f32 %v310, %v326
  %v329 = vpack.c.bf16 %v328, %v328
  %v331 = vrot.slane %v329, 4
  %332 = vrot.lane.b32.xlu0 %v331, 32
  %v333 = vpop.permute.xlu0 %332
  %vm335 = vcmask 261124
  %336 = vst.msk [vmem:[#allocation3] sm:$0xf0] %vm335, %v333
  %v337 = vld [vmem:[#allocation2 + $0x10] sm:$0xff]
  %338 = vrot.lane.b32.xlu0 %v329, 32
  %v339 = vpop.permute.xlu0 %338
  %v341 = vsel %vm184, %v339, 0
  %343 = vmatprep.subr.bf16.mxu0 0
  %344 = vmatpush1.bf16.msra.mxu0 %v180
  %345 = vmatprep.subr.bf16.mxu0 0
  %346 = vmatpush1.bf16.msra.mxu0 %v181
  %347 = vmatprep.subr.bf16.mxu0 0
  %348 = vmatpush1.bf16.msra.mxu0 0
  %349 = vmatprep.subr.bf16.mxu0 0
  %350 = vmatpush1.bf16.msra.mxu0 0
  %351 = vmatprep.subr.bf16.mxu0 0
  %352 = vmatpush1.bf16.msra.mxu0 0
  %353 = vmatprep.subr.bf16.mxu0 0
  %354 = vmatpush1.bf16.msra.mxu0 0
  %355 = vmatprep.subr.bf16.mxu0 0
  %356 = vmatpush1.bf16.msra.mxu0 0
  %357 = vmatprep.subr.bf16.mxu0 0
  %358 = vmatpush1.bf16.msra.mxu0 0
  %359 = vmatprep.subr.bf16.mxu0 0
  %360 = vmatpush1.bf16.msra.mxu0 0
  %361 = vmatprep.subr.bf16.mxu0 0
  %362 = vmatpush1.bf16.msra.mxu0 0
  %363 = vmatprep.subr.bf16.mxu0 0
  %364 = vmatpush1.bf16.msra.mxu0 0
  %365 = vmatprep.subr.bf16.mxu0 0
  %366 = vmatpush1.bf16.msra.mxu0 0
  %367 = vmatprep.subr.bf16.mxu0 0
  %368 = vmatpush1.bf16.msra.mxu0 0
  %369 = vmatprep.subr.bf16.mxu0 0
  %370 = vmatpush1.bf16.msra.mxu0 0
  %371 = vmatprep.subr.bf16.mxu0 0
  %372 = vmatpush1.bf16.msra.mxu0 0
  %373 = vmatprep.subr.bf16.mxu0 0
  %374 = vmatpush1.bf16.msra.mxu0 0
  %375 = vmatprep.mubr.bf16.mxu0 0
  %376 = vmatmul.mubr.bf16.gmra.mrb[0].mxu0 %v341
  %v377 = vpop.f32.mrb[0].mxu0
  %v378 = vadd.f32 0.0, %v377
  %v379 = vpop.f32.mrb[0].mxu0
  %v380 = vpop.f32.mrb[0].mxu0
  %v381 = vpop.f32.mrb[0].mxu0
  %382 = vdwg.mxu0
  %v383 = vadd.f32 %v337, %v378
  %v384 = vxor.u32 %v383, 2147483648
  %v385 = vmul.f32 %v384, 1.442695
  %v386 = vpow.pop %v385
  %v387 = vadd.f32 %v386, 1.0
  %v388 = vrcp.pop %v387
  %v389 = vmul.f32 1.0, %v388
  %v390 = vtanh.pop %v383
  %v391 = vmul.f32 %v389, %v322
  %393 = vrot.lane.b32.xlu0 %v390, 64
  %v394 = vpop.permute.xlu0 %393
  %v396 = vmul.f32 %v389, %v394
  %398 = vrot.lane.b32.xlu0 %v396, 32
  %v399 = vpop.permute.xlu0 %398
  %v401 = vadd.f32 %v391, %v399
  %v402 = vtanh.pop %v401
  %404 = vrot.lane.b32.xlu0 %v402, 64
  %v405 = vpop.permute.xlu0 %404
  %v407 = vmul.f32 %v389, %v405
  %v408 = vpack.c.bf16 %v407, %v407
  %410 = vrot.lane.b32.xlu0 %v408, 32
  %v411 = vpop.permute.xlu0 %410
  %413 = vst.msk [vmem:[#allocation3 + $0x8] sm:$0xf] %vm258, %v411
  %v414 = vld [vmem:[#allocation2 + $0x18] sm:$0xff]
  %v416 = vsel %vm184, %v411, 0
  %418 = vmatprep.subr.bf16.mxu0 0
  %419 = vmatpush1.bf16.msra.mxu0 %v180
  %420 = vmatprep.subr.bf16.mxu0 0
  %421 = vmatpush1.bf16.msra.mxu0 %v181
  %422 = vmatprep.subr.bf16.mxu0 0
  %423 = vmatpush1.bf16.msra.mxu0 0
  %424 = vmatprep.subr.bf16.mxu0 0
  %425 = vmatpush1.bf16.msra.mxu0 0
  %426 = vmatprep.subr.bf16.mxu0 0
  %427 = vmatpush1.bf16.msra.mxu0 0
  %428 = vmatprep.subr.bf16.mxu0 0
  %429 = vmatpush1.bf16.msra.mxu0 0
  %430 = vmatprep.subr.bf16.mxu0 0
  %431 = vmatpush1.bf16.msra.mxu0 0
  %432 = vmatprep.subr.bf16.mxu0 0
  %433 = vmatpush1.bf16.msra.mxu0 0
  %434 = vmatprep.subr.bf16.mxu0 0
  %435 = vmatpush1.bf16.msra.mxu0 0
  %436 = vmatprep.subr.bf16.mxu0 0
  %437 = vmatpush1.bf16.msra.mxu0 0
  %438 = vmatprep.subr.bf16.mxu0 0
  %439 = vmatpush1.bf16.msra.mxu0 0
  %440 = vmatprep.subr.bf16.mxu0 0
  %441 = vmatpush1.bf16.msra.mxu0 0
  %442 = vmatprep.subr.bf16.mxu0 0
  %443 = vmatpush1.bf16.msra.mxu0 0
  %444 = vmatprep.subr.bf16.mxu0 0
  %445 = vmatpush1.bf16.msra.mxu0 0
  %446 = vmatprep.subr.bf16.mxu0 0
  %447 = vmatpush1.bf16.msra.mxu0 0
  %448 = vmatprep.subr.bf16.mxu0 0
  %449 = vmatpush1.bf16.msra.mxu0 0
  %450 = vmatprep.mubr.bf16.mxu0 0
  %451 = vmatmul.mubr.bf16.gmra.mrb[0].mxu0 %v416
  %v452 = vpop.f32.mrb[0].mxu0
  %v453 = vadd.f32 0.0, %v452
  %v454 = vpop.f32.mrb[0].mxu0
  %v455 = vpop.f32.mrb[0].mxu0
  %v456 = vpop.f32.mrb[0].mxu0
  %457 = vdwg.mxu0
  %v458 = vadd.f32 %v414, %v453
  %v459 = vxor.u32 %v458, 2147483648
  %v460 = vmul.f32 %v459, 1.442695
  %v461 = vpow.pop %v460
  %v462 = vadd.f32 %v461, 1.0
  %v463 = vrcp.pop %v462
  %v464 = vmul.f32 1.0, %v463
  %v465 = vtanh.pop %v458
  %v466 = vmul.f32 %v464, %v401
  %468 = vrot.lane.b32.xlu0 %v465, 64
  %v469 = vpop.permute.xlu0 %468
  %v471 = vmul.f32 %v464, %v469
  %473 = vrot.lane.b32.xlu0 %v471, 32
  %v474 = vpop.permute.xlu0 %473
  %v476 = vadd.f32 %v466, %v474
  %v477 = vtanh.pop %v476
  %479 = vrot.lane.b32.xlu0 %v477, 64
  %v480 = vpop.permute.xlu0 %479
  %v482 = vmul.f32 %v464, %v480
  %v483 = vpack.c.bf16 %v482, %v482
  %v485 = vrot.slane %v483, 4
  %486 = vrot.lane.b32.xlu0 %v485, 32
  %v487 = vpop.permute.xlu0 %486
  %489 = vst.msk [vmem:[#allocation3 + $0x8] sm:$0xf0] %vm335, %v487
  %v490 = vld [vmem:[#allocation2 + $0x20] sm:$0xff]
  %491 = vrot.lane.b32.xlu0 %v483, 32
  %v492 = vpop.permute.xlu0 %491
  %v494 = vsel %vm184, %v492, 0
  %496 = vmatprep.subr.bf16.mxu0 0
  %497 = vmatpush1.bf16.msra.mxu0 %v180
  %498 = vmatprep.subr.bf16.mxu0 0
  %499 = vmatpush1.bf16.msra.mxu0 %v181
  %500 = vmatprep.subr.bf16.mxu0 0
  %501 = vmatpush1.bf16.msra.mxu0 0
  %502 = vmatprep.subr.bf16.mxu0 0
  %503 = vmatpush1.bf16.msra.mxu0 0
  %504 = vmatprep.subr.bf16.mxu0 0
  %505 = vmatpush1.bf16.msra.mxu0 0
  %506 = vmatprep.subr.bf16.mxu0 0
  %507 = vmatpush1.bf16.msra.mxu0 0
  %508 = vmatprep.subr.bf16.mxu0 0
  %509 = vmatpush1.bf16.msra.mxu0 0
  %510 = vmatprep.subr.bf16.mxu0 0
  %511 = vmatpush1.bf16.msra.mxu0 0
  %512 = vmatprep.subr.bf16.mxu0 0
  %513 = vmatpush1.bf16.msra.mxu0 0
  %514 = vmatprep.subr.bf16.mxu0 0
  %515 = vmatpush1.bf16.msra.mxu0 0
  %516 = vmatprep.subr.bf16.mxu0 0
  %517 = vmatpush1.bf16.msra.mxu0 0
  %518 = vmatprep.subr.bf16.mxu0 0
  %519 = vmatpush1.bf16.msra.mxu0 0
  %520 = vmatprep.subr.bf16.mxu0 0
  %521 = vmatpush1.bf16.msra.mxu0 0
  %522 = vmatprep.subr.bf16.mxu0 0
  %523 = vmatpush1.bf16.msra.mxu0 0
  %524 = vmatprep.subr.bf16.mxu0 0
  %525 = vmatpush1.bf16.msra.mxu0 0
  %526 = vmatprep.subr.bf16.mxu0 0
  %527 = vmatpush1.bf16.msra.mxu0 0
  %528 = vmatprep.mubr.bf16.mxu0 0
  %529 = vmatmul.mubr.bf16.gmra.mrb[0].mxu0 %v494
  %v530 = vpop.f32.mrb[0].mxu0
  %v531 = vadd.f32 0.0, %v530
  %v532 = vpop.f32.mrb[0].mxu0
  %v533 = vpop.f32.mrb[0].mxu0
  %v534 = vpop.f32.mrb[0].mxu0
  %535 = vdwg.mxu0
  %v536 = vadd.f32 %v490, %v531
  %v537 = vxor.u32 %v536, 2147483648
  %v538 = vmul.f32 %v537, 1.442695
  %v539 = vpow.pop %v538
  %v540 = vadd.f32 %v539, 1.0
  %v541 = vrcp.pop %v540
  %v542 = vmul.f32 1.0, %v541
  %v543 = vtanh.pop %v536
  %v544 = vmul.f32 %v542, %v476
  %546 = vrot.lane.b32.xlu0 %v543, 64
  %v547 = vpop.permute.xlu0 %546
  %v549 = vmul.f32 %v542, %v547
  %551 = vrot.lane.b32.xlu0 %v549, 32
  %v552 = vpop.permute.xlu0 %551
  %v554 = vadd.f32 %v544, %v552
  %v555 = vtanh.pop %v554
  %557 = vrot.lane.b32.xlu0 %v555, 64
  %v558 = vpop.permute.xlu0 %557
  %v560 = vmul.f32 %v542, %v558
  %v561 = vpack.c.bf16 %v560, %v560
  %563 = vrot.lane.b32.xlu0 %v561, 32
  %v564 = vpop.permute.xlu0 %563
  %566 = vst.msk [vmem:[#allocation3 + $0x10] sm:$0xf] %vm258, %v564
  %v567 = vld [vmem:[#allocation2 + $0x28] sm:$0xff]
  %v569 = vsel %vm184, %v564, 0
  %571 = vmatprep.subr.bf16.mxu0 0
  %572 = vmatpush1.bf16.msra.mxu0 %v180
  %573 = vmatprep.subr.bf16.mxu0 0
  %574 = vmatpush1.bf16.msra.mxu0 %v181
  %575 = vmatprep.subr.bf16.mxu0 0
  %576 = vmatpush1.bf16.msra.mxu0 0
  %577 = vmatprep.subr.bf16.mxu0 0
  %578 = vmatpush1.bf16.msra.mxu0 0
  %579 = vmatprep.subr.bf16.mxu0 0
  %580 = vmatpush1.bf16.msra.mxu0 0
  %581 = vmatprep.subr.bf16.mxu0 0
  %582 = vmatpush1.bf16.msra.mxu0 0
  %583 = vmatprep.subr.bf16.mxu0 0
  %584 = vmatpush1.bf16.msra.mxu0 0
  %585 = vmatprep.subr.bf16.mxu0 0
  %586 = vmatpush1.bf16.msra.mxu0 0
  %587 = vmatprep.subr.bf16.mxu0 0
  %588 = vmatpush1.bf16.msra.mxu0 0
  %589 = vmatprep.subr.bf16.mxu0 0
  %590 = vmatpush1.bf16.msra.mxu0 0
  %591 = vmatprep.subr.bf16.mxu0 0
  %592 = vmatpush1.bf16.msra.mxu0 0
  %593 = vmatprep.subr.bf16.mxu0 0
  %594 = vmatpush1.bf16.msra.mxu0 0
  %595 = vmatprep.subr.bf16.mxu0 0
  %596 = vmatpush1.bf16.msra.mxu0 0
  %597 = vmatprep.subr.bf16.mxu0 0
  %598 = vmatpush1.bf16.msra.mxu0 0
  %599 = vmatprep.subr.bf16.mxu0 0
  %600 = vmatpush1.bf16.msra.mxu0 0
  %601 = vmatprep.subr.bf16.mxu0 0
  %602 = vmatpush1.bf16.msra.mxu0 0
  %603 = vmatprep.mubr.bf16.mxu0 0
  %604 = vmatmul.mubr.bf16.gmra.mrb[0].mxu0 %v569
  %v605 = vpop.f32.mrb[0].mxu0
  %v606 = vadd.f32 0.0, %v605
  %v607 = vpop.f32.mrb[0].mxu0
  %v608 = vpop.f32.mrb[0].mxu0
  %v609 = vpop.f32.mrb[0].mxu0
  %610 = vdwg.mxu0
  %v611 = vadd.f32 %v567, %v606
  %v612 = vxor.u32 %v611, 2147483648
  %v613 = vmul.f32 %v612, 1.442695
  %v614 = vpow.pop %v613
  %v615 = vadd.f32 %v614, 1.0
  %v616 = vrcp.pop %v615
  %v617 = vmul.f32 1.0, %v616
  %v618 = vtanh.pop %v611
  %v619 = vmul.f32 %v617, %v554
  %621 = vrot.lane.b32.xlu0 %v618, 64
  %v622 = vpop.permute.xlu0 %621
  %v624 = vmul.f32 %v617, %v622
  %626 = vrot.lane.b32.xlu0 %v624, 32
  %v627 = vpop.permute.xlu0 %626
  %v629 = vadd.f32 %v619, %v627
  %v630 = vtanh.pop %v629
  %632 = vrot.lane.b32.xlu0 %v630, 64
  %v633 = vpop.permute.xlu0 %632
  %v635 = vmul.f32 %v617, %v633
  %v636 = vpack.c.bf16 %v635, %v635
  %v638 = vrot.slane %v636, 4
  %639 = vrot.lane.b32.xlu0 %v638, 32
  %v640 = vpop.permute.xlu0 %639
  %642 = vst.msk [vmem:[#allocation3 + $0x10] sm:$0xf0] %vm335, %v640
  %v643 = vld [vmem:[#allocation2 + $0x30] sm:$0xff]
  %644 = vrot.lane.b32.xlu0 %v636, 32
  %v645 = vpop.permute.xlu0 %644
  %v647 = vsel %vm184, %v645, 0
  %649 = vmatprep.subr.bf16.mxu0 0
  %650 = vmatpush1.bf16.msra.mxu0 %v180
  %651 = vmatprep.subr.bf16.mxu0 0
  %652 = vmatpush1.bf16.msra.mxu0 %v181
  %653 = vmatprep.subr.bf16.mxu0 0
  %654 = vmatpush1.bf16.msra.mxu0 0
  %655 = vmatprep.subr.bf16.mxu0 0
  %656 = vmatpush1.bf16.msra.mxu0 0
  %657 = vmatprep.subr.bf16.mxu0 0
  %658 = vmatpush1.bf16.msra.mxu0 0
  %659 = vmatprep.subr.bf16.mxu0 0
  %660 = vmatpush1.bf16.msra.mxu0 0
  %661 = vmatprep.subr.bf16.mxu0 0
  %662 = vmatpush1.bf16.msra.mxu0 0
  %663 = vmatprep.subr.bf16.mxu0 0
  %664 = vmatpush1.bf16.msra.mxu0 0
  %665 = vmatprep.subr.bf16.mxu0 0
  %666 = vmatpush1.bf16.msra.mxu0 0
  %667 = vmatprep.subr.bf16.mxu0 0
  %668 = vmatpush1.bf16.msra.mxu0 0
  %669 = vmatprep.subr.bf16.mxu0 0
  %670 = vmatpush1.bf16.msra.mxu0 0
  %671 = vmatprep.subr.bf16.mxu0 0
  %672 = vmatpush1.bf16.msra.mxu0 0
  %673 = vmatprep.subr.bf16.mxu0 0
  %674 = vmatpush1.bf16.msra.mxu0 0
  %675 = vmatprep.subr.bf16.mxu0 0
  %676 = vmatpush1.bf16.msra.mxu0 0
  %677 = vmatprep.subr.bf16.mxu0 0
  %678 = vmatpush1.bf16.msra.mxu0 0
  %679 = vmatprep.subr.bf16.mxu0 0
  %680 = vmatpush1.bf16.msra.mxu0 0
  %681 = vmatprep.mubr.bf16.mxu0 0
  %682 = vmatmul.mubr.bf16.gmra.mrb[0].mxu0 %v647
  %v683 = vpop.f32.mrb[0].mxu0
  %v684 = vadd.f32 0.0, %v683
  %v685 = vpop.f32.mrb[0].mxu0
  %v686 = vpop.f32.mrb[0].mxu0
  %v687 = vpop.f32.mrb[0].mxu0
  %688 = vdwg.mxu0
  %v689 = vadd.f32 %v643, %v684
  %v690 = vxor.u32 %v689, 2147483648
  %v691 = vmul.f32 %v690, 1.442695
  %v692 = vpow.pop %v691
  %v693 = vadd.f32 %v692, 1.0
  %v694 = vrcp.pop %v693
  %v695 = vmul.f32 1.0, %v694
  %v696 = vtanh.pop %v689
  %v697 = vmul.f32 %v695, %v629
  %699 = vrot.lane.b32.xlu0 %v696, 64
  %v700 = vpop.permute.xlu0 %699
  %v702 = vmul.f32 %v695, %v700
  %704 = vrot.lane.b32.xlu0 %v702, 32
  %v705 = vpop.permute.xlu0 %704
  %v707 = vadd.f32 %v697, %v705
  %v708 = vtanh.pop %v707
  %710 = vrot.lane.b32.xlu0 %v708, 64
  %v711 = vpop.permute.xlu0 %710
  %v713 = vmul.f32 %v695, %v711
  %v714 = vpack.c.bf16 %v713, %v713
  %716 = vrot.lane.b32.xlu0 %v714, 32
  %v717 = vpop.permute.xlu0 %716
  %719 = vst.msk [vmem:[#allocation3 + $0x18] sm:$0xf] %vm258, %v717
  %v720 = vld [vmem:[#allocation2 + $0x38] sm:$0xff]
  %v722 = vsel %vm184, %v717, 0
  %724 = vmatprep.subr.bf16.mxu0 0
  %725 = vmatpush1.bf16.msra.mxu0 %v180
  %726 = vmatprep.subr.bf16.mxu0 0
  %727 = vmatpush1.bf16.msra.mxu0 %v181
  %728 = vmatprep.subr.bf16.mxu0 0
  %729 = vmatpush1.bf16.msra.mxu0 0
  %730 = vmatprep.subr.bf16.mxu0 0
  %731 = vmatpush1.bf16.msra.mxu0 0
  %732 = vmatprep.subr.bf16.mxu0 0
  %733 = vmatpush1.bf16.msra.mxu0 0
  %734 = vmatprep.subr.bf16.mxu0 0
  %735 = vmatpush1.bf16.msra.mxu0 0
  %736 = vmatprep.subr.bf16.mxu0 0
  %737 = vmatpush1.bf16.msra.mxu0 0
  %738 = vmatprep.subr.bf16.mxu0 0
  %739 = vmatpush1.bf16.msra.mxu0 0
  %740 = vmatprep.subr.bf16.mxu0 0
  %741 = vmatpush1.bf16.msra.mxu0 0
  %742 = vmatprep.subr.bf16.mxu0 0
  %743 = vmatpush1.bf16.msra.mxu0 0
  %744 = vmatprep.subr.bf16.mxu0 0
  %745 = vmatpush1.bf16.msra.mxu0 0
  %746 = vmatprep.subr.bf16.mxu0 0
  %747 = vmatpush1.bf16.msra.mxu0 0
  %748 = vmatprep.subr.bf16.mxu0 0
  %749 = vmatpush1.bf16.msra.mxu0 0
  %750 = vmatprep.subr.bf16.mxu0 0
  %751 = vmatpush1.bf16.msra.mxu0 0
  %752 = vmatprep.subr.bf16.mxu0 0
  %753 = vmatpush1.bf16.msra.mxu0 0
  %754 = vmatprep.subr.bf16.mxu0 0
  %755 = vmatpush1.bf16.msra.mxu0 0
  %756 = vmatprep.mubr.bf16.mxu0 0
  %757 = vmatmul.mubr.bf16.gmra.mrb[0].mxu0 %v722
  %v758 = vpop.f32.mrb[0].mxu0
  %v759 = vadd.f32 0.0, %v758
  %v760 = vpop.f32.mrb[0].mxu0
  %v761 = vpop.f32.mrb[0].mxu0
  %v762 = vpop.f32.mrb[0].mxu0
  %763 = vdwg.mxu0
  %v764 = vadd.f32 %v720, %v759
  %v765 = vxor.u32 %v764, 2147483648
  %v766 = vmul.f32 %v765, 1.442695
  %v767 = vpow.pop %v766
  %v768 = vadd.f32 %v767, 1.0
  %v769 = vrcp.pop %v768
  %v770 = vmul.f32 1.0, %v769
  %v771 = vtanh.pop %v764
  %v772 = vmul.f32 %v770, %v707
  %774 = vrot.lane.b32.xlu0 %v771, 64
  %v775 = vpop.permute.xlu0 %774
  %v777 = vmul.f32 %v770, %v775
  %779 = vrot.lane.b32.xlu0 %v777, 32
  %v780 = vpop.permute.xlu0 %779
  %v782 = vadd.f32 %v772, %v780
  %v783 = vtanh.pop %v782
  %785 = vrot.lane.b32.xlu0 %v783, 64
  %v786 = vpop.permute.xlu0 %785
  %v788 = vmul.f32 %v770, %v786
  %v789 = vpack.c.bf16 %v788, %v788
  %v791 = vrot.slane %v789, 4
  %792 = vrot.lane.b32.xlu0 %v791, 32
  %v793 = vpop.permute.xlu0 %792
  %795 = vst.msk [vmem:[#allocation3 + $0x18] sm:$0xf0] %vm335, %v793
  %v796 = vld [vmem:[#allocation3] sm:$0xff]
  %v797 = vld [vmem:[#allocation3 + $0x8] sm:$0xff]
  %v798 = vld [vmem:[#allocation3 + $0x10] sm:$0xff]
  %v799 = vld [vmem:[#allocation3 + $0x18] sm:$0xff]
  %v800 = vld [vmem:[%s4] sm:$0xf]
  %v801 = vld [vmem:[%s4 + $0x4] sm:$0xf]
  %v802 = vld [vmem:[%s4 + $0x8] sm:$0xf]
  %v803 = vld [vmem:[%s4 + $0xc] sm:$0xf]
  %v804 = vld [vmem:[%s6] sm:$0x1]
  %v806 = vlaneseq
  %v807 = vshrl.u32 %v806, 7
  %v808 = vsub.s32 0, %v807
  %v809 = vrot.slane %v804, %v808
  %v815 = vunpack.c.l.b16 %v800
  %v816 = vunpack.c.l.b16 %v801
  %v817 = vunpack.c.l.b16 %v802
  %v818 = vunpack.c.l.b16 %v803
  %v819 = vpack.c.b16 %v816, %v815
  %v820 = vpack.c.b16 %v818, %v817
  %v824 = vsel %vm184, %v796, 0
  %v827 = vsel %vm184, %v797, 0
  %v830 = vsel %vm184, %v798, 0
  %v833 = vsel %vm184, %v799, 0
  %835 = vmatprep.subr.bf16.mxu0 0
  %836 = vmatpush1.bf16.msra.mxu0 %v819
  %837 = vmatprep.subr.bf16.mxu0 0
  %838 = vmatpush1.bf16.msra.mxu0 %v820
  %839 = vmatprep.subr.bf16.mxu0 0
  %840 = vmatpush1.bf16.msra.mxu0 0
  %841 = vmatprep.subr.bf16.mxu0 0
  %842 = vmatpush1.bf16.msra.mxu0 0
  %843 = vmatprep.subr.bf16.mxu0 0
  %844 = vmatpush1.bf16.msra.mxu0 0
  %845 = vmatprep.subr.bf16.mxu0 0
  %846 = vmatpush1.bf16.msra.mxu0 0
  %847 = vmatprep.subr.bf16.mxu0 0
  %848 = vmatpush1.bf16.msra.mxu0 0
  %849 = vmatprep.subr.bf16.mxu0 0
  %850 = vmatpush1.bf16.msra.mxu0 0
  %851 = vmatprep.subr.bf16.mxu0 0
  %852 = vmatpush1.bf16.msra.mxu0 0
  %853 = vmatprep.subr.bf16.mxu0 0
  %854 = vmatpush1.bf16.msra.mxu0 0
  %855 = vmatprep.subr.bf16.mxu0 0
  %856 = vmatpush1.bf16.msra.mxu0 0
  %857 = vmatprep.subr.bf16.mxu0 0
  %858 = vmatpush1.bf16.msra.mxu0 0
  %859 = vmatprep.subr.bf16.mxu0 0
  %860 = vmatpush1.bf16.msra.mxu0 0
  %861 = vmatprep.subr.bf16.mxu0 0
  %862 = vmatpush1.bf16.msra.mxu0 0
  %863 = vmatprep.subr.bf16.mxu0 0
  %864 = vmatpush1.bf16.msra.mxu0 0
  %865 = vmatprep.subr.bf16.mxu0 0
  %866 = vmatpush1.bf16.msra.mxu0 0
  %867 = vmatprep.mubr.bf16.mxu0 0
  %868 = vmatmul.mubr.bf16.gmra.mrb[0].mxu0 %v824
  %v869 = vpop.f32.mrb[0].mxu0
  %v870 = vadd.f32 %v809, %v869
  %v871 = vpop.f32.mrb[0].mxu0
  %v872 = vpop.f32.mrb[0].mxu0
  %v873 = vadd.f32 %v809, %v872
  %v874 = vpop.f32.mrb[0].mxu0
  %875 = vmatprep.mubr.bf16.mxu0 0
  %876 = vmatmul.mubr.bf16.gmra.mrb[0].mxu0 %v827
  %v877 = vpop.f32.mrb[0].mxu0
  %v878 = vadd.f32 %v809, %v877
  %v879 = vpop.f32.mrb[0].mxu0
  %v880 = vpop.f32.mrb[0].mxu0
  %v881 = vadd.f32 %v809, %v880
  %v882 = vpop.f32.mrb[0].mxu0
  %883 = vmatprep.mubr.bf16.mxu0 0
  %884 = vmatmul.mubr.bf16.gmra.mrb[0].mxu0 %v830
  %v885 = vpop.f32.mrb[0].mxu0
  %v886 = vadd.f32 %v809, %v885
  %v887 = vpop.f32.mrb[0].mxu0
  %v888 = vpop.f32.mrb[0].mxu0
  %v889 = vadd.f32 %v809, %v888
  %v890 = vpop.f32.mrb[0].mxu0
  %891 = vmatprep.mubr.bf16.mxu0 0
  %892 = vmatmul.mubr.bf16.gmra.mrb[0].mxu0 %v833
  %v893 = vpop.f32.mrb[0].mxu0
  %v894 = vadd.f32 %v809, %v893
  %v895 = vpop.f32.mrb[0].mxu0
  %v896 = vpop.f32.mrb[0].mxu0
  %v897 = vadd.f32 %v809, %v896
  %v898 = vpop.f32.mrb[0].mxu0
  %899 = vdwg.mxu0
  %900 = vst [vmem:[#allocation2] sm:$0xff] %v870
  %901 = vst [vmem:[#allocation2 + $0x8] sm:$0xff] %v873
  %902 = vst [vmem:[#allocation2 + $0x10] sm:$0xff] %v878
  %903 = vst [vmem:[#allocation2 + $0x18] sm:$0xff] %v881
  %904 = vst [vmem:[#allocation2 + $0x20] sm:$0xff] %v886
  %905 = vst [vmem:[#allocation2 + $0x28] sm:$0xff] %v889
  %906 = vst [vmem:[#allocation2 + $0x30] sm:$0xff] %v894
  %907 = vst [vmem:[#allocation2 + $0x38] sm:$0xff] %v897
  %v908 = vld [vmem:[%s5] sm:$0xf]
  %v909 = vld [vmem:[%s5 + $0x4] sm:$0xf]
  %v910 = vld [vmem:[%s5 + $0x8] sm:$0xf]
  %v911 = vld [vmem:[%s5 + $0xc] sm:$0xf]
  %v912 = vld [vmem:[#allocation2] sm:$0xff]
  %v917 = vunpack.c.l.b16 %v908
  %v918 = vunpack.c.l.b16 %v909
  %v919 = vunpack.c.l.b16 %v910
  %v920 = vunpack.c.l.b16 %v911
  %v921 = vpack.c.b16 %v918, %v917
  %v922 = vpack.c.b16 %v920, %v919
  %925 = vmatprep.subr.bf16.mxu0 0
  %926 = vmatpush1.bf16.msra.mxu0 %v921
  %927 = vmatprep.subr.bf16.mxu0 0
  %928 = vmatpush1.bf16.msra.mxu0 %v922
  %929 = vmatprep.subr.bf16.mxu0 0
  %930 = vmatpush1.bf16.msra.mxu0 0
  %931 = vmatprep.subr.bf16.mxu0 0
  %932 = vmatpush1.bf16.msra.mxu0 0
  %933 = vmatprep.subr.bf16.mxu0 0
  %934 = vmatpush1.bf16.msra.mxu0 0
  %935 = vmatprep.subr.bf16.mxu0 0
  %936 = vmatpush1.bf16.msra.mxu0 0
  %937 = vmatprep.subr.bf16.mxu0 0
  %938 = vmatpush1.bf16.msra.mxu0 0
  %939 = vmatprep.subr.bf16.mxu0 0
  %940 = vmatpush1.bf16.msra.mxu0 0
  %941 = vmatprep.subr.bf16.mxu0 0
  %942 = vmatpush1.bf16.msra.mxu0 0
  %943 = vmatprep.subr.bf16.mxu0 0
  %944 = vmatpush1.bf16.msra.mxu0 0
  %945 = vmatprep.subr.bf16.mxu0 0
  %946 = vmatpush1.bf16.msra.mxu0 0
  %947 = vmatprep.subr.bf16.mxu0 0
  %948 = vmatpush1.bf16.msra.mxu0 0
  %949 = vmatprep.subr.bf16.mxu0 0
  %950 = vmatpush1.bf16.msra.mxu0 0
  %951 = vmatprep.subr.bf16.mxu0 0
  %952 = vmatpush1.bf16.msra.mxu0 0
  %953 = vmatprep.subr.bf16.mxu0 0
  %954 = vmatpush1.bf16.msra.mxu0 0
  %955 = vmatprep.subr.bf16.mxu0 0
  %956 = vmatpush1.bf16.msra.mxu0 0
  %957 = vmatprep.mubr.bf16.mxu0 0
  %958 = vmatmul.mubr.bf16.gmra.mrb[0].mxu0 %v186
  %v959 = vpop.f32.mrb[0].mxu0
  %v960 = vadd.f32 0.0, %v959
  %v961 = vpop.f32.mrb[0].mxu0
  %v962 = vpop.f32.mrb[0].mxu0
  %v963 = vpop.f32.mrb[0].mxu0
  %964 = vdwg.mxu0
  %v965 = vadd.f32 %v912, %v960
  %v966 = vxor.u32 %v965, 2147483648
  %v967 = vmul.f32 %v966, 1.442695
  %v968 = vpow.pop %v967
  %v969 = vadd.f32 %v968, 1.0
  %v970 = vrcp.pop %v969
  %v971 = vmul.f32 1.0, %v970
  %v972 = vtanh.pop %v965
  %v973 = vmul.f32 %v971, 0.0
  %975 = vrot.lane.b32.xlu0 %v972, 64
  %v976 = vpop.permute.xlu0 %975
  %v978 = vmul.f32 %v971, %v976
  %980 = vrot.lane.b32.xlu0 %v978, 32
  %v981 = vpop.permute.xlu0 %980
  %v983 = vadd.f32 %v973, %v981
  %v984 = vtanh.pop %v983
  %986 = vrot.lane.b32.xlu0 %v984, 64
  %v987 = vpop.permute.xlu0 %986
  %v989 = vmul.f32 %v971, %v987
  %v990 = vpack.c.bf16 %v989, %v989
  %v991 = vld [vmem:[#allocation2 + $0x8] sm:$0xff]
  %993 = vrot.lane.b32.xlu0 %v990, 32
  %v994 = vpop.permute.xlu0 %993
  %v996 = vsel %vm184, %v994, 0
  %998 = vmatprep.subr.bf16.mxu0 0
  %999 = vmatpush1.bf16.msra.mxu0 %v921
  %1000 = vmatprep.subr.bf16.mxu0 0
  %1001 = vmatpush1.bf16.msra.mxu0 %v922
  %1002 = vmatprep.subr.bf16.mxu0 0
  %1003 = vmatpush1.bf16.msra.mxu0 0
  %1004 = vmatprep.subr.bf16.mxu0 0
  %1005 = vmatpush1.bf16.msra.mxu0 0
  %1006 = vmatprep.subr.bf16.mxu0 0
  %1007 = vmatpush1.bf16.msra.mxu0 0
  %1008 = vmatprep.subr.bf16.mxu0 0
  %1009 = vmatpush1.bf16.msra.mxu0 0
  %1010 = vmatprep.subr.bf16.mxu0 0
  %1011 = vmatpush1.bf16.msra.mxu0 0
  %1012 = vmatprep.subr.bf16.mxu0 0
  %1013 = vmatpush1.bf16.msra.mxu0 0
  %1014 = vmatprep.subr.bf16.mxu0 0
  %1015 = vmatpush1.bf16.msra.mxu0 0
  %1016 = vmatprep.subr.bf16.mxu0 0
  %1017 = vmatpush1.bf16.msra.mxu0 0
  %1018 = vmatprep.subr.bf16.mxu0 0
  %1019 = vmatpush1.bf16.msra.mxu0 0
  %1020 = vmatprep.subr.bf16.mxu0 0
  %1021 = vmatpush1.bf16.msra.mxu0 0
  %1022 = vmatprep.subr.bf16.mxu0 0
  %1023 = vmatpush1.bf16.msra.mxu0 0
  %1024 = vmatprep.subr.bf16.mxu0 0
  %1025 = vmatpush1.bf16.msra.mxu0 0
  %1026 = vmatprep.subr.bf16.mxu0 0
  %1027 = vmatpush1.bf16.msra.mxu0 0
  %1028 = vmatprep.subr.bf16.mxu0 0
  %1029 = vmatpush1.bf16.msra.mxu0 0
  %1030 = vmatprep.mubr.bf16.mxu0 0
  %1031 = vmatmul.mubr.bf16.gmra.mrb[0].mxu0 %v996
  %v1032 = vpop.f32.mrb[0].mxu0
  %v1033 = vadd.f32 0.0, %v1032
  %v1034 = vpop.f32.mrb[0].mxu0
  %v1035 = vpop.f32.mrb[0].mxu0
  %v1036 = vpop.f32.mrb[0].mxu0
  %1037 = vdwg.mxu0
  %v1038 = vadd.f32 %v991, %v1033
  %v1039 = vxor.u32 %v1038, 2147483648
  %v1040 = vmul.f32 %v1039, 1.442695
  %v1041 = vpow.pop %v1040
  %v1042 = vadd.f32 %v1041, 1.0
  %v1043 = vrcp.pop %v1042
  %v1044 = vmul.f32 1.0, %v1043
  %v1045 = vtanh.pop %v1038
  %v1046 = vmul.f32 %v1044, %v983
  %1048 = vrot.lane.b32.xlu0 %v1045, 64
  %v1049 = vpop.permute.xlu0 %1048
  %v1051 = vmul.f32 %v1044, %v1049
  %1053 = vrot.lane.b32.xlu0 %v1051, 32
  %v1054 = vpop.permute.xlu0 %1053
  %v1056 = vadd.f32 %v1046, %v1054
  %v1057 = vtanh.pop %v1056
  %1059 = vrot.lane.b32.xlu0 %v1057, 64
  %v1060 = vpop.permute.xlu0 %1059
  %v1062 = vmul.f32 %v1044, %v1060
  %v1063 = vpack.c.bf16 %v1062, %v1062
  %v1064 = vld [vmem:[#allocation2 + $0x10] sm:$0xff]
  %1066 = vrot.lane.b32.xlu0 %v1063, 32
  %v1067 = vpop.permute.xlu0 %1066
  %v1069 = vsel %vm184, %v1067, 0
  %1071 = vmatprep.subr.bf16.mxu0 0
  %1072 = vmatpush1.bf16.msra.mxu0 %v921
  %1073 = vmatprep.subr.bf16.mxu0 0
  %1074 = vmatpush1.bf16.msra.mxu0 %v922
  %1075 = vmatprep.subr.bf16.mxu0 0
  %1076 = vmatpush1.bf16.msra.mxu0 0
  %1077 = vmatprep.subr.bf16.mxu0 0
  %1078 = vmatpush1.bf16.msra.mxu0 0
  %1079 = vmatprep.subr.bf16.mxu0 0
  %1080 = vmatpush1.bf16.msra.mxu0 0
  %1081 = vmatprep.subr.bf16.mxu0 0
  %1082 = vmatpush1.bf16.msra.mxu0 0
  %1083 = vmatprep.subr.bf16.mxu0 0
  %1084 = vmatpush1.bf16.msra.mxu0 0
  %1085 = vmatprep.subr.bf16.mxu0 0
  %1086 = vmatpush1.bf16.msra.mxu0 0
  %1087 = vmatprep.subr.bf16.mxu0 0
  %1088 = vmatpush1.bf16.msra.mxu0 0
  %1089 = vmatprep.subr.bf16.mxu0 0
  %1090 = vmatpush1.bf16.msra.mxu0 0
  %1091 = vmatprep.subr.bf16.mxu0 0
  %1092 = vmatpush1.bf16.msra.mxu0 0
  %1093 = vmatprep.subr.bf16.mxu0 0
  %1094 = vmatpush1.bf16.msra.mxu0 0
  %1095 = vmatprep.subr.bf16.mxu0 0
  %1096 = vmatpush1.bf16.msra.mxu0 0
  %1097 = vmatprep.subr.bf16.mxu0 0
  %1098 = vmatpush1.bf16.msra.mxu0 0
  %1099 = vmatprep.subr.bf16.mxu0 0
  %1100 = vmatpush1.bf16.msra.mxu0 0
  %1101 = vmatprep.subr.bf16.mxu0 0
  %1102 = vmatpush1.bf16.msra.mxu0 0
  %1103 = vmatprep.mubr.bf16.mxu0 0
  %1104 = vmatmul.mubr.bf16.gmra.mrb[0].mxu0 %v1069
  %v1105 = vpop.f32.mrb[0].mxu0
  %v1106 = vadd.f32 0.0, %v1105
  %v1107 = vpop.f32.mrb[0].mxu0
  %v1108 = vpop.f32.mrb[0].mxu0
  %v1109 = vpop.f32.mrb[0].mxu0
  %1110 = vdwg.mxu0
  %v1111 = vadd.f32 %v1064, %v1106
  %v1112 = vxor.u32 %v1111, 2147483648
  %v1113 = vmul.f32 %v1112, 1.442695
  %v1114 = vpow.pop %v1113
  %v1115 = vadd.f32 %v1114, 1.0
  %v1116 = vrcp.pop %v1115
  %v1117 = vmul.f32 1.0, %v1116
  %v1118 = vtanh.pop %v1111
  %v1119 = vmul.f32 %v1117, %v1056
  %1121 = vrot.lane.b32.xlu0 %v1118, 64
  %v1122 = vpop.permute.xlu0 %1121
  %v1124 = vmul.f32 %v1117, %v1122
  %1126 = vrot.lane.b32.xlu0 %v1124, 32
  %v1127 = vpop.permute.xlu0 %1126
  %v1129 = vadd.f32 %v1119, %v1127
  %v1130 = vtanh.pop %v1129
  %1132 = vrot.lane.b32.xlu0 %v1130, 64
  %v1133 = vpop.permute.xlu0 %1132
  %v1135 = vmul.f32 %v1117, %v1133
  %v1136 = vpack.c.bf16 %v1135, %v1135
  %v1137 = vld [vmem:[#allocation2 + $0x18] sm:$0xff]
  %1139 = vrot.lane.b32.xlu0 %v1136, 32
  %v1140 = vpop.permute.xlu0 %1139
  %v1142 = vsel %vm184, %v1140, 0
  %1144 = vmatprep.subr.bf16.mxu0 0
  %1145 = vmatpush1.bf16.msra.mxu0 %v921
  %1146 = vmatprep.subr.bf16.mxu0 0
  %1147 = vmatpush1.bf16.msra.mxu0 %v922
  %1148 = vmatprep.subr.bf16.mxu0 0
  %1149 = vmatpush1.bf16.msra.mxu0 0
  %1150 = vmatprep.subr.bf16.mxu0 0
  %1151 = vmatpush1.bf16.msra.mxu0 0
  %1152 = vmatprep.subr.bf16.mxu0 0
  %1153 = vmatpush1.bf16.msra.mxu0 0
  %1154 = vmatprep.subr.bf16.mxu0 0
  %1155 = vmatpush1.bf16.msra.mxu0 0
  %1156 = vmatprep.subr.bf16.mxu0 0
  %1157 = vmatpush1.bf16.msra.mxu0 0
  %1158 = vmatprep.subr.bf16.mxu0 0
  %1159 = vmatpush1.bf16.msra.mxu0 0
  %1160 = vmatprep.subr.bf16.mxu0 0
  %1161 = vmatpush1.bf16.msra.mxu0 0
  %1162 = vmatprep.subr.bf16.mxu0 0
  %1163 = vmatpush1.bf16.msra.mxu0 0
  %1164 = vmatprep.subr.bf16.mxu0 0
  %1165 = vmatpush1.bf16.msra.mxu0 0
  %1166 = vmatprep.subr.bf16.mxu0 0
  %1167 = vmatpush1.bf16.msra.mxu0 0
  %1168 = vmatprep.subr.bf16.mxu0 0
  %1169 = vmatpush1.bf16.msra.mxu0 0
  %1170 = vmatprep.subr.bf16.mxu0 0
  %1171 = vmatpush1.bf16.msra.mxu0 0
  %1172 = vmatprep.subr.bf16.mxu0 0
  %1173 = vmatpush1.bf16.msra.mxu0 0
  %1174 = vmatprep.subr.bf16.mxu0 0
  %1175 = vmatpush1.bf16.msra.mxu0 0
  %1176 = vmatprep.mubr.bf16.mxu0 0
  %1177 = vmatmul.mubr.bf16.gmra.mrb[0].mxu0 %v1142
  %v1178 = vpop.f32.mrb[0].mxu0
  %v1179 = vadd.f32 0.0, %v1178
  %v1180 = vpop.f32.mrb[0].mxu0
  %v1181 = vpop.f32.mrb[0].mxu0
  %v1182 = vpop.f32.mrb[0].mxu0
  %1183 = vdwg.mxu0
  %v1184 = vadd.f32 %v1137, %v1179
  %v1185 = vxor.u32 %v1184, 2147483648
  %v1186 = vmul.f32 %v1185, 1.442695
  %v1187 = vpow.pop %v1186
  %v1188 = vadd.f32 %v1187, 1.0
  %v1189 = vrcp.pop %v1188
  %v1190 = vmul.f32 1.0, %v1189
  %v1191 = vtanh.pop %v1184
  %v1192 = vmul.f32 %v1190, %v1129
  %1194 = vrot.lane.b32.xlu0 %v1191, 64
  %v1195 = vpop.permute.xlu0 %1194
  %v1197 = vmul.f32 %v1190, %v1195
  %1199 = vrot.lane.b32.xlu0 %v1197, 32
  %v1200 = vpop.permute.xlu0 %1199
  %v1202 = vadd.f32 %v1192, %v1200
  %v1203 = vtanh.pop %v1202
  %1205 = vrot.lane.b32.xlu0 %v1203, 64
  %v1206 = vpop.permute.xlu0 %1205
  %v1208 = vmul.f32 %v1190, %v1206
  %v1209 = vpack.c.bf16 %v1208, %v1208
  %v1210 = vld [vmem:[#allocation2 + $0x20] sm:$0xff]
  %1212 = vrot.lane.b32.xlu0 %v1209, 32
  %v1213 = vpop.permute.xlu0 %1212
  %v1215 = vsel %vm184, %v1213, 0
  %1217 = vmatprep.subr.bf16.mxu0 0
  %1218 = vmatpush1.bf16.msra.mxu0 %v921
  %1219 = vmatprep.subr.bf16.mxu0 0
  %1220 = vmatpush1.bf16.msra.mxu0 %v922
  %1221 = vmatprep.subr.bf16.mxu0 0
  %1222 = vmatpush1.bf16.msra.mxu0 0
  %1223 = vmatprep.subr.bf16.mxu0 0
  %1224 = vmatpush1.bf16.msra.mxu0 0
  %1225 = vmatprep.subr.bf16.mxu0 0
  %1226 = vmatpush1.bf16.msra.mxu0 0
  %1227 = vmatprep.subr.bf16.mxu0 0
  %1228 = vmatpush1.bf16.msra.mxu0 0
  %1229 = vmatprep.subr.bf16.mxu0 0
  %1230 = vmatpush1.bf16.msra.mxu0 0
  %1231 = vmatprep.subr.bf16.mxu0 0
  %1232 = vmatpush1.bf16.msra.mxu0 0
  %1233 = vmatprep.subr.bf16.mxu0 0
  %1234 = vmatpush1.bf16.msra.mxu0 0
  %1235 = vmatprep.subr.bf16.mxu0 0
  %1236 = vmatpush1.bf16.msra.mxu0 0
  %1237 = vmatprep.subr.bf16.mxu0 0
  %1238 = vmatpush1.bf16.msra.mxu0 0
  %1239 = vmatprep.subr.bf16.mxu0 0
  %1240 = vmatpush1.bf16.msra.mxu0 0
  %1241 = vmatprep.subr.bf16.mxu0 0
  %1242 = vmatpush1.bf16.msra.mxu0 0
  %1243 = vmatprep.subr.bf16.mxu0 0
  %1244 = vmatpush1.bf16.msra.mxu0 0
  %1245 = vmatprep.subr.bf16.mxu0 0
  %1246 = vmatpush1.bf16.msra.mxu0 0
  %1247 = vmatprep.subr.bf16.mxu0 0
  %1248 = vmatpush1.bf16.msra.mxu0 0
  %1249 = vmatprep.mubr.bf16.mxu0 0
  %1250 = vmatmul.mubr.bf16.gmra.mrb[0].mxu0 %v1215
  %v1251 = vpop.f32.mrb[0].mxu0
  %v1252 = vadd.f32 0.0, %v1251
  %v1253 = vpop.f32.mrb[0].mxu0
  %v1254 = vpop.f32.mrb[0].mxu0
  %v1255 = vpop.f32.mrb[0].mxu0
  %1256 = vdwg.mxu0
  %v1257 = vadd.f32 %v1210, %v1252
  %v1258 = vxor.u32 %v1257, 2147483648
  %v1259 = vmul.f32 %v1258, 1.442695
  %v1260 = vpow.pop %v1259
  %v1261 = vadd.f32 %v1260, 1.0
  %v1262 = vrcp.pop %v1261
  %v1263 = vmul.f32 1.0, %v1262
  %v1264 = vtanh.pop %v1257
  %v1265 = vmul.f32 %v1263, %v1202
  %1267 = vrot.lane.b32.xlu0 %v1264, 64
  %v1268 = vpop.permute.xlu0 %1267
  %v1270 = vmul.f32 %v1263, %v1268
  %1272 = vrot.lane.b32.xlu0 %v1270, 32
  %v1273 = vpop.permute.xlu0 %1272
  %v1275 = vadd.f32 %v1265, %v1273
  %v1276 = vtanh.pop %v1275
  %1278 = vrot.lane.b32.xlu0 %v1276, 64
  %v1279 = vpop.permute.xlu0 %1278
  %v1281 = vmul.f32 %v1263, %v1279
  %v1282 = vpack.c.bf16 %v1281, %v1281
  %v1283 = vld [vmem:[#allocation2 + $0x28] sm:$0xff]
  %1285 = vrot.lane.b32.xlu0 %v1282, 32
  %v1286 = vpop.permute.xlu0 %1285
  %v1288 = vsel %vm184, %v1286, 0
  %1290 = vmatprep.subr.bf16.mxu0 0
  %1291 = vmatpush1.bf16.msra.mxu0 %v921
  %1292 = vmatprep.subr.bf16.mxu0 0
  %1293 = vmatpush1.bf16.msra.mxu0 %v922
  %1294 = vmatprep.subr.bf16.mxu0 0
  %1295 = vmatpush1.bf16.msra.mxu0 0
  %1296 = vmatprep.subr.bf16.mxu0 0
  %1297 = vmatpush1.bf16.msra.mxu0 0
  %1298 = vmatprep.subr.bf16.mxu0 0
  %1299 = vmatpush1.bf16.msra.mxu0 0
  %1300 = vmatprep.subr.bf16.mxu0 0
  %1301 = vmatpush1.bf16.msra.mxu0 0
  %1302 = vmatprep.subr.bf16.mxu0 0
  %1303 = vmatpush1.bf16.msra.mxu0 0
  %1304 = vmatprep.subr.bf16.mxu0 0
  %1305 = vmatpush1.bf16.msra.mxu0 0
  %1306 = vmatprep.subr.bf16.mxu0 0
  %1307 = vmatpush1.bf16.msra.mxu0 0
  %1308 = vmatprep.subr.bf16.mxu0 0
  %1309 = vmatpush1.bf16.msra.mxu0 0
  %1310 = vmatprep.subr.bf16.mxu0 0
  %1311 = vmatpush1.bf16.msra.mxu0 0
  %1312 = vmatprep.subr.bf16.mxu0 0
  %1313 = vmatpush1.bf16.msra.mxu0 0
  %1314 = vmatprep.subr.bf16.mxu0 0
  %1315 = vmatpush1.bf16.msra.mxu0 0
  %1316 = vmatprep.subr.bf16.mxu0 0
  %1317 = vmatpush1.bf16.msra.mxu0 0
  %1318 = vmatprep.subr.bf16.mxu0 0
  %1319 = vmatpush1.bf16.msra.mxu0 0
  %1320 = vmatprep.subr.bf16.mxu0 0
  %1321 = vmatpush1.bf16.msra.mxu0 0
  %1322 = vmatprep.mubr.bf16.mxu0 0
  %1323 = vmatmul.mubr.bf16.gmra.mrb[0].mxu0 %v1288
  %v1324 = vpop.f32.mrb[0].mxu0
  %v1325 = vadd.f32 0.0, %v1324
  %v1326 = vpop.f32.mrb[0].mxu0
  %v1327 = vpop.f32.mrb[0].mxu0
  %v1328 = vpop.f32.mrb[0].mxu0
  %1329 = vdwg.mxu0
  %v1330 = vadd.f32 %v1283, %v1325
  %v1331 = vxor.u32 %v1330, 2147483648
  %v1332 = vmul.f32 %v1331, 1.442695
  %v1333 = vpow.pop %v1332
  %v1334 = vadd.f32 %v1333, 1.0
  %v1335 = vrcp.pop %v1334
  %v1336 = vmul.f32 1.0, %v1335
  %v1337 = vtanh.pop %v1330
  %v1338 = vmul.f32 %v1336, %v1275
  %1340 = vrot.lane.b32.xlu0 %v1337, 64
  %v1341 = vpop.permute.xlu0 %1340
  %v1343 = vmul.f32 %v1336, %v1341
  %1345 = vrot.lane.b32.xlu0 %v1343, 32
  %v1346 = vpop.permute.xlu0 %1345
  %v1348 = vadd.f32 %v1338, %v1346
  %v1349 = vtanh.pop %v1348
  %1351 = vrot.lane.b32.xlu0 %v1349, 64
  %v1352 = vpop.permute.xlu0 %1351
  %v1354 = vmul.f32 %v1336, %v1352
  %v1355 = vpack.c.bf16 %v1354, %v1354
  %v1356 = vld [vmem:[#allocation2 + $0x30] sm:$0xff]
  %1358 = vrot.lane.b32.xlu0 %v1355, 32
  %v1359 = vpop.permute.xlu0 %1358
  %v1361 = vsel %vm184, %v1359, 0
  %1363 = vmatprep.subr.bf16.mxu0 0
  %1364 = vmatpush1.bf16.msra.mxu0 %v921
  %1365 = vmatprep.subr.bf16.mxu0 0
  %1366 = vmatpush1.bf16.msra.mxu0 %v922
  %1367 = vmatprep.subr.bf16.mxu0 0
  %1368 = vmatpush1.bf16.msra.mxu0 0
  %1369 = vmatprep.subr.bf16.mxu0 0
  %1370 = vmatpush1.bf16.msra.mxu0 0
  %1371 = vmatprep.subr.bf16.mxu0 0
  %1372 = vmatpush1.bf16.msra.mxu0 0
  %1373 = vmatprep.subr.bf16.mxu0 0
  %1374 = vmatpush1.bf16.msra.mxu0 0
  %1375 = vmatprep.subr.bf16.mxu0 0
  %1376 = vmatpush1.bf16.msra.mxu0 0
  %1377 = vmatprep.subr.bf16.mxu0 0
  %1378 = vmatpush1.bf16.msra.mxu0 0
  %1379 = vmatprep.subr.bf16.mxu0 0
  %1380 = vmatpush1.bf16.msra.mxu0 0
  %1381 = vmatprep.subr.bf16.mxu0 0
  %1382 = vmatpush1.bf16.msra.mxu0 0
  %1383 = vmatprep.subr.bf16.mxu0 0
  %1384 = vmatpush1.bf16.msra.mxu0 0
  %1385 = vmatprep.subr.bf16.mxu0 0
  %1386 = vmatpush1.bf16.msra.mxu0 0
  %1387 = vmatprep.subr.bf16.mxu0 0
  %1388 = vmatpush1.bf16.msra.mxu0 0
  %1389 = vmatprep.subr.bf16.mxu0 0
  %1390 = vmatpush1.bf16.msra.mxu0 0
  %1391 = vmatprep.subr.bf16.mxu0 0
  %1392 = vmatpush1.bf16.msra.mxu0 0
  %1393 = vmatprep.subr.bf16.mxu0 0
  %1394 = vmatpush1.bf16.msra.mxu0 0
  %1395 = vmatprep.mubr.bf16.mxu0 0
  %1396 = vmatmul.mubr.bf16.gmra.mrb[0].mxu0 %v1361
  %v1397 = vpop.f32.mrb[0].mxu0
  %v1398 = vadd.f32 0.0, %v1397
  %v1399 = vpop.f32.mrb[0].mxu0
  %v1400 = vpop.f32.mrb[0].mxu0
  %v1401 = vpop.f32.mrb[0].mxu0
  %1402 = vdwg.mxu0
  %v1403 = vadd.f32 %v1356, %v1398
  %v1404 = vxor.u32 %v1403, 2147483648
  %v1405 = vmul.f32 %v1404, 1.442695
  %v1406 = vpow.pop %v1405
  %v1407 = vadd.f32 %v1406, 1.0
  %v1408 = vrcp.pop %v1407
  %v1409 = vmul.f32 1.0, %v1408
  %v1410 = vtanh.pop %v1403
  %v1411 = vmul.f32 %v1409, %v1348
  %1413 = vrot.lane.b32.xlu0 %v1410, 64
  %v1414 = vpop.permute.xlu0 %1413
  %v1416 = vmul.f32 %v1409, %v1414
  %1418 = vrot.lane.b32.xlu0 %v1416, 32
  %v1419 = vpop.permute.xlu0 %1418
  %v1421 = vadd.f32 %v1411, %v1419
  %v1422 = vtanh.pop %v1421
  %1424 = vrot.lane.b32.xlu0 %v1422, 64
  %v1425 = vpop.permute.xlu0 %1424
  %v1427 = vmul.f32 %v1409, %v1425
  %v1428 = vpack.c.bf16 %v1427, %v1427
  %v1429 = vld [vmem:[#allocation2 + $0x38] sm:$0xff]
  %1431 = vrot.lane.b32.xlu0 %v1428, 32
  %v1432 = vpop.permute.xlu0 %1431
  %v1434 = vsel %vm184, %v1432, 0
  %1436 = vmatprep.subr.bf16.mxu0 0
  %1437 = vmatpush1.bf16.msra.mxu0 %v921
  %1438 = vmatprep.subr.bf16.mxu0 0
  %1439 = vmatpush1.bf16.msra.mxu0 %v922
  %1440 = vmatprep.subr.bf16.mxu0 0
  %1441 = vmatpush1.bf16.msra.mxu0 0
  %1442 = vmatprep.subr.bf16.mxu0 0
  %1443 = vmatpush1.bf16.msra.mxu0 0
  %1444 = vmatprep.subr.bf16.mxu0 0
  %1445 = vmatpush1.bf16.msra.mxu0 0
  %1446 = vmatprep.subr.bf16.mxu0 0
  %1447 = vmatpush1.bf16.msra.mxu0 0
  %1448 = vmatprep.subr.bf16.mxu0 0
  %1449 = vmatpush1.bf16.msra.mxu0 0
  %1450 = vmatprep.subr.bf16.mxu0 0
  %1451 = vmatpush1.bf16.msra.mxu0 0
  %1452 = vmatprep.subr.bf16.mxu0 0
  %1453 = vmatpush1.bf16.msra.mxu0 0
  %1454 = vmatprep.subr.bf16.mxu0 0
  %1455 = vmatpush1.bf16.msra.mxu0 0
  %1456 = vmatprep.subr.bf16.mxu0 0
  %1457 = vmatpush1.bf16.msra.mxu0 0
  %1458 = vmatprep.subr.bf16.mxu0 0
  %1459 = vmatpush1.bf16.msra.mxu0 0
  %1460 = vmatprep.subr.bf16.mxu0 0
  %1461 = vmatpush1.bf16.msra.mxu0 0
  %1462 = vmatprep.subr.bf16.mxu0 0
  %1463 = vmatpush1.bf16.msra.mxu0 0
  %1464 = vmatprep.subr.bf16.mxu0 0
  %1465 = vmatpush1.bf16.msra.mxu0 0
  %1466 = vmatprep.subr.bf16.mxu0 0
  %1467 = vmatpush1.bf16.msra.mxu0 0
  %1468 = vmatprep.mubr.bf16.mxu0 0
  %1469 = vmatmul.mubr.bf16.gmra.mrb[0].mxu0 %v1434
  %v1470 = vpop.f32.mrb[0].mxu0
  %v1471 = vadd.f32 0.0, %v1470
  %v1472 = vpop.f32.mrb[0].mxu0
  %v1473 = vpop.f32.mrb[0].mxu0
  %v1474 = vpop.f32.mrb[0].mxu0
  %1475 = vdwg.mxu0
  %v1476 = vadd.f32 %v1429, %v1471
  %v1477 = vxor.u32 %v1476, 2147483648
  %v1478 = vmul.f32 %v1477, 1.442695
  %v1479 = vpow.pop %v1478
  %v1480 = vadd.f32 %v1479, 1.0
  %v1481 = vrcp.pop %v1480
  %v1482 = vmul.f32 1.0, %v1481
  %v1483 = vtanh.pop %v1476
  %v1484 = vmul.f32 %v1482, %v1421
  %1486 = vrot.lane.b32.xlu0 %v1483, 64
  %v1487 = vpop.permute.xlu0 %1486
  %v1489 = vmul.f32 %v1482, %v1487
  %1491 = vrot.lane.b32.xlu0 %v1489, 32
  %v1492 = vpop.permute.xlu0 %1491
  %v1494 = vadd.f32 %v1484, %v1492
  %v1495 = vtanh.pop %v1494
  %1497 = vrot.lane.b32.xlu0 %v1495, 64
  %v1498 = vpop.permute.xlu0 %1497
  %v1500 = vmul.f32 %v1482, %v1498
  %v1501 = vpack.c.bf16 %v1500, %v1500
  %v1502 = vld [vmem:[%s7] sm:$0xf]
  %v1503 = vld [vmem:[%s7 + $0x4] sm:$0xf]
  %v1504 = vld [vmem:[%s7 + $0x8] sm:$0xf]
  %v1505 = vld [vmem:[%s7 + $0xc] sm:$0xf]
  %v1506 = vld [vmem:[%s8] sm:$0x1]
  %v1508 = vlaneseq
  %v1509 = vshrl.u32 %v1508, 7
  %v1510 = vsub.s32 0, %v1509
  %v1511 = vrot.slane %v1506, %v1510
  %1514 = vrot.lane.b32.xlu0 %v1501, 32
  %v1515 = vpop.permute.xlu0 %1514
  %v1520 = vunpack.c.l.b16 %v1502
  %v1521 = vunpack.c.l.b16 %v1503
  %v1522 = vunpack.c.l.b16 %v1504
  %v1523 = vunpack.c.l.b16 %v1505
  %v1524 = vpack.c.b16 %v1521, %v1520
  %v1525 = vpack.c.b16 %v1523, %v1522
  %v1529 = vsel %vm184, %v1515, 0
  %1531 = vmatprep.subr.bf16.mxu0 0
  %1532 = vmatpush1.bf16.msra.mxu0 %v1524
  %1533 = vmatprep.subr.bf16.mxu0 0
  %1534 = vmatpush1.bf16.msra.mxu0 %v1525
  %1535 = vmatprep.subr.bf16.mxu0 0
  %1536 = vmatpush1.bf16.msra.mxu0 0
  %1537 = vmatprep.subr.bf16.mxu0 0
  %1538 = vmatpush1.bf16.msra.mxu0 0
  %1539 = vmatprep.subr.bf16.mxu0 0
  %1540 = vmatpush1.bf16.msra.mxu0 0
  %1541 = vmatprep.subr.bf16.mxu0 0
  %1542 = vmatpush1.bf16.msra.mxu0 0
  %1543 = vmatprep.subr.bf16.mxu0 0
  %1544 = vmatpush1.bf16.msra.mxu0 0
  %1545 = vmatprep.subr.bf16.mxu0 0
  %1546 = vmatpush1.bf16.msra.mxu0 0
  %1547 = vmatprep.subr.bf16.mxu0 0
  %1548 = vmatpush1.bf16.msra.mxu0 0
  %1549 = vmatprep.subr.bf16.mxu0 0
  %1550 = vmatpush1.bf16.msra.mxu0 0
  %1551 = vmatprep.subr.bf16.mxu0 0
  %1552 = vmatpush1.bf16.msra.mxu0 0
  %1553 = vmatprep.subr.bf16.mxu0 0
  %1554 = vmatpush1.bf16.msra.mxu0 0
  %1555 = vmatprep.subr.bf16.mxu0 0
  %1556 = vmatpush1.bf16.msra.mxu0 0
  %1557 = vmatprep.subr.bf16.mxu0 0
  %1558 = vmatpush1.bf16.msra.mxu0 0
  %1559 = vmatprep.subr.bf16.mxu0 0
  %1560 = vmatpush1.bf16.msra.mxu0 0
  %1561 = vmatprep.subr.bf16.mxu0 0
  %1562 = vmatpush1.bf16.msra.mxu0 0
  %1563 = vmatprep.mubr.bf16.mxu0 0
  %1564 = vmatmul.mubr.bf16.gmra.mrb[0].mxu0 %v1529
  %v1565 = vpop.f32.mrb[0].mxu0
  %v1566 = vadd.f32 %v1511, %v1565
  %v1567 = vpop.f32.mrb[0].mxu0
  %v1568 = vpop.f32.mrb[0].mxu0
  %v1569 = vpop.f32.mrb[0].mxu0
  %1570 = vdwg.mxu0
  %v1571 = vmax.f32 %v1566, 0.0
  %v1572 = vld [vmem:[%s9] sm:$0x1]
  %v1574 = vlaneseq
  %v1575 = vshrl.u32 %v1574, 7
  %v1576 = vsub.s32 0, %v1575
  %v1577 = vrot.slane %v1572, %v1576
  %v1579 = vmul.f32 %v1571, %v1577
  %vm1580 = vcmask 523264
  %v1581 = vsel %vm1580, %v1579, 0.0
  %1582 = vadd.xlane.f32.xlu0 %v1581
  %v1583 = vpop.xlane.xlu0 %1582
  %v1584 = vld [vmem:[#allocation4] sm:$0x1]
  %v1586 = vlaneseq
  %v1587 = vshrl.u32 %v1586, 7
  %v1588 = vsub.s32 0, %v1587
  %v1589 = vrot.slane %v1584, %v1588
  %v1591 = vadd.f32 %v1583, %v1589
  %vm1592 = vcmask 7168
  %1593 = vst.msk [vmem:[%s11] sm:$0xff] %vm1592, %v1591
  // Predicated region
  $region46: #{sol_price_lstm_forward.1} parent=0 // pred_check
    _
  $region47: #{sol_price_lstm_forward.1} parent=0 // pred_check_branch
    %1595 = sbr.rel (0) target = $region49
  $region48: #{sol_price_lstm_forward.1} parent=0 // pred_region
    _
  $region49: #{sol_price_lstm_forward.1} parent=0 // pred_fallthru
    _
  // Predicated region
  $region50: #{sol_price_lstm_forward.1} parent=0 // pred_check
    _
  $region51: #{sol_price_lstm_forward.1} parent=0 // pred_check_branch
    %1597 = sbr.rel (0) target = $region53
  $region52: #{sol_price_lstm_forward.1} parent=0 // pred_region
    _
  $region53: #{sol_price_lstm_forward.1} parent=0 // pred_fallthru
    _

</llo_original>
